<compile_context>
chip_gen: v6e
topology: v6e:2x2x1
jax: 0.10.0
libtpu: 0.0.40
codegen_flags: <defaults>
</compile_context>

<pallas_src>
import numpy as np
import jax
import jax.numpy as jnp
from jax.experimental import pallas as pl
from jax.experimental.pallas import tpu as pltpu

NUM_JOINTS = 16
NOISE_CH = 45
LINEAR_SIZE = 256
NUM_STAGE = 2
LRELU_SLOPE = 0.01
BN_EPS = 1e-5
LANE = 128
ROW_W = 3 * LANE          # 384: one row = 128 interleaved xyz points (lane-dense, 3 | W)
ROTP_STRIDE = 5           # per-sample rotation params: [kx, ky, kz, cos(th), sin(th)]


def _round_up(x, m):
    return (x + m - 1) // m * m


# --------------------------------------------------------------------------- #
# Kernel 1: generator MLP (w1_R -> BN -> LReLU -> 4 x [linear -> BN -> LReLU])
#           with the axis-angle head fused into the tail.
# Outputs: r (N, 256) f32 and head (N, 4) f32 = [unit axis kx, ky, kz, theta].
# Linear biases are omitted on purpose: train-mode BN subtracts the batch mean,
# so a per-column bias cancels exactly (mean and variance are unchanged).
# --------------------------------------------------------------------------- #
def _mlp_head_kernel(x_ref, eps_ref, w1_ref, g1_ref, be1_ref,
                     sw_ref, sg_ref, sbe_ref, r_ref, head_ref):
    def bn_lrelu(y, gamma, beta):
        # training-mode BatchNorm1d: batch mean, biased variance, eps=1e-5 (f32)
        mean = jnp.mean(y, axis=0, keepdims=True)
        var = jnp.mean(jnp.square(y - mean), axis=0, keepdims=True)
        y = (y - mean) * jax.lax.rsqrt(var + BN_EPS) * gamma + beta
        return jnp.where(y >= 0.0, y, LRELU_SLOPE * y)

    y = jnp.dot(x_ref[...].astype(jnp.bfloat16), w1_ref[...],
                preferred_element_type=jnp.float32)
    y = bn_lrelu(y, g1_ref[...], be1_ref[...])
    for k in range(2 * NUM_STAGE):      # 2 stages x 2 (linear, BN, LReLU) each
        y = jnp.dot(y.astype(jnp.bfloat16), sw_ref[k],
                    preferred_element_type=jnp.float32)
        y = bn_lrelu(y, sg_ref[k], sbe_ref[k])
    r_ref[...] = y

    # fused axis-angle head (everything except cos/sin):
    #   r_axis ~ Normal(r[:, :3], (r[:, 3:6])^2) realized with the provided eps draw,
    #   then normalized to a unit axis; theta = r[:, 6].
    a_mean = y[:, 0:3]
    a_sig = y[:, 3:6] * y[:, 3:6]
    axis = a_mean + a_sig * eps_ref[...]
    n2 = jnp.sum(axis * axis, axis=-1, keepdims=True)
    axis = axis * jax.lax.rsqrt(jnp.maximum(n2, 1e-24))   # guard (see header note)
    head_ref[:, 0:3] = axis
    head_ref[:, 3:4] = y[:, 6:7]


# --------------------------------------------------------------------------- #
# Kernel 2: per-sample rotation applied directly to the interleaved xyz stream.
#   rp_ref (SMEM, (N*5,) f32): per sample [kx, ky, kz, cos(theta), sin(theta)]
#   x_ref / o_ref (VMEM, (r_tile, 384)): rows of 128 interleaved points.
# Each row starts on an x coordinate (384 % 3 == 0), so every source a point needs
# lives within the same row and is reached by lane-rolls of 0, +-1, +-2.  The
# coefficient row-vectors are built from an index probe rolled with the *same*
# pltpu.roll as the data, making the result independent of the roll direction
# convention; wrapped lanes land in a different xyz triple and are masked to 0.
# --------------------------------------------------------------------------- #
def _rot_kernel(rp_ref, x_ref, o_ref):
    n = pl.program_id(0)
    kx = rp_ref[n * ROTP_STRIDE + 0]
    ky = rp_ref[n * ROTP_STRIDE + 1]
    kz = rp_ref[n * ROTP_STRIDE + 2]
    c = rp_ref[n * ROTP_STRIDE + 3]
    s = rp_ref[n * ROTP_STRIDE + 4]
    t = 1.0 - c

    # Rodrigues rotation matrix entries (scalar unit; free vs the vector work below)
    R = ((c + kx * kx * t, kx * ky * t - kz * s, kx * kz * t + ky * s),
         (ky * kx * t + kz * s, c + ky * ky * t, ky * kz * t - kx * s),
         (kz * kx * t - ky * s, kz * ky * t + kx * s, c + kz * kz * t))

    w = x_ref.shape[-1]                                   # 384 (multiple of 3 and 128)
    q = jax.lax.broadcasted_iota(jnp.int32, (1, w), 1).astype(jnp.float32)
    t_out = jnp.floor(q / 3.0)                            # xyz-triple index per lane
    c_out = q - 3.0 * t_out                               # output coordinate (0/1/2)
    # R[c_out, j] as a (1, w) row vector, for each source coordinate j
    sel = [jnp.where(c_out == 0.0, R[0][j],
                     jnp.where(c_out == 1.0, R[1][j], R[2][j])) for j in range(3)]

    v = x_ref[...]                                        # (r_tile, w) f32
    acc = None
    for shift in (0, 1, 2, w - 1, w - 2):                 # all-positive static shifts
        if shift == 0:
            qs, vs = q, v
        else:
            qs = pltpu.roll(q, shift, axis=1)             # index probe
            vs = pltpu.roll(v, shift, axis=1)             # data (XLU slot)
        t_src = jnp.floor(qs / 3.0)
        c_src = qs - 3.0 * t_src
        pick = jnp.where(c_src == 0.0, sel[0],
                         jnp.where(c_src == 1.0, sel[1], sel[2]))
        coef = jnp.where(t_src == t_out, pick, 0.0)       # (1, w); wraps masked out
        term = coef * vs                                  # broadcast over sublanes
        acc = term if acc is None else acc + term
    o_ref[...] = acc


def _choose_row_tile(n_samples, n_rows):
    """Rows per block (one row = 128 points).  Multiple of 8 (or the full extent),
    capped at 512 rows (~768 KiB/block); if there is a single sample, force >= 2 row
    blocks so both v7x TensorCores get work."""
    if n_rows <= 8:
        return n_rows
    tile = min(512, (n_rows // 8) * 8)
    if n_samples == 1 and tile >= n_rows:
        tile = max(8, ((n_rows // 2 + 7) // 8) * 8)
        if tile >= n_rows:
            tile = 8
    return tile


# --------------------------------------------------------------------------- #
# Parameter init (deterministic, PyTorch-Linear-like uniform weight init).
# Biases are intentionally not created: they are exact no-ops through train-mode BN.
# --------------------------------------------------------------------------- #
def init_params(key, input_size):
    ks = jax.random.split(key, 1 + 2 * NUM_STAGE)
    kin = input_size + NOISE_CH
    kin_pad = _round_up(kin, LANE)                        # 93 -> 128 (lane-dense K)

    def linear_w(k, fin, fout, fin_pad=None):
        bound = 1.0 / float(np.sqrt(fin))
        w = jax.random.uniform(k, (fin, fout), jnp.float32, -bound, bound)
        if fin_pad is not None and fin_pad > fin:
            w = jnp.pad(w, ((0, fin_pad - fin), (0, 0)))  # zero rows: result unchanged
        return w

    w1 = linear_w(ks[0], kin, LINEAR_SIZE, kin_pad)
    sw = jnp.stack([linear_w(ks[1 + i], LINEAR_SIZE, LINEAR_SIZE)
                    for i in range(2 * NUM_STAGE)])

    return dict(
        w1=w1.astype(jnp.bfloat16),
        g1=jnp.ones((1, LINEAR_SIZE), jnp.float32),
        be1=jnp.zeros((1, LINEAR_SIZE), jnp.float32),
        sw=sw.astype(jnp.bfloat16),
        sg=jnp.ones((2 * NUM_STAGE, 1, LINEAR_SIZE), jnp.float32),
        sbe=jnp.zeros((2 * NUM_STAGE, 1, LINEAR_SIZE), jnp.float32),
    )


# --------------------------------------------------------------------------- #
# Forward wrapper.  XLA glue is limited to the tiny O(N) input prep, one cos/sin
# concatenate, and (only when T*J is not a multiple of 128) a bounded pad.
# --------------------------------------------------------------------------- #
def rt_generator_forward(inputs_3d, augx, params, noise, axis_eps):
    # inputs_3d: (N, 1, T, 16, 3); augx: (N, T, 16, 3)
    x4 = inputs_3d[:, 0]
    n, t_frames = x4.shape[0], x4.shape[1]
    mid = (t_frames - 1) // 2
    xm = x4[:, mid]                                       # middle frame (N, 16, 3)
    xrel = (xm - xm[:, :1, :]).reshape(n, -1)             # root-relative, (N, 48)
    xcat = jnp.concatenate([xrel, noise], axis=-1)        # (N, 93)
    kpad = _round_up(xcat.shape[1], LANE)
    xcat = jnp.pad(xcat, ((0, 0), (0, kpad - xcat.shape[1])))

    r, head = pl.pallas_call(
        _mlp_head_kernel,
        out_shape=(jax.ShapeDtypeStruct((n, LINEAR_SIZE), jnp.float32),
                   jax.ShapeDtypeStruct((n, 4), jnp.float32)),
        in_specs=[pl.BlockSpec(memory_space=pltpu.MemorySpace.VMEM)] * 8,
        out_specs=(pl.BlockSpec(memory_space=pltpu.MemorySpace.VMEM),
                   pl.BlockSpec(memory_space=pltpu.MemorySpace.VMEM)),
    )(xcat, axis_eps, params["w1"], params["g1"], params["be1"],
      params["sw"], params["sg"], params["sbe"])

    # single tiny XLA op: cos/sin + one concatenate -> flat 1-D SMEM params
    th = head[:, 3:4]
    rotp = jnp.concatenate([head[:, 0:3], jnp.cos(th), jnp.sin(th)],
                           axis=-1).reshape(-1)           # (N*5,) f32

    # rotation: natural interleaved layout viewed as (N, R, 384) rows of 128 points
    na, ta, j, cc = augx.shape
    flat = ta * j * cc
    flat_pad = _round_up(flat, ROW_W)                     # waste bounded by < 128 points
    xf = augx.reshape(na, flat)
    if flat_pad != flat:
        xf = jnp.pad(xf, ((0, 0), (0, flat_pad - flat)))
    n_rows = flat_pad // ROW_W
    r_tile = _choose_row_tile(na, n_rows)
    n_blocks = pl.cdiv(n_rows, r_tile)

    out = pl.pallas_call(
        _rot_kernel,
        out_shape=jax.ShapeDtypeStruct((na, n_rows, ROW_W), jnp.float32),
        grid=(na, n_blocks),
        in_specs=[
            pl.BlockSpec(memory_space=pltpu.MemorySpace.SMEM),          # flat scalars
            pl.BlockSpec((None, r_tile, ROW_W), lambda i, b: (i, b, 0)),
        ],
        out_specs=pl.BlockSpec((None, r_tile, ROW_W), lambda i, b: (i, b, 0)),
        compiler_params=pltpu.CompilerParams(
            dimension_semantics=("parallel", "parallel")),
    )(rotp, xf.reshape(na, n_rows, ROW_W))

    augx_r = out.reshape(na, flat_pad)[:, :flat].reshape(na, ta, j, cc)
    return augx_r, (r, 0)


if __name__ == "__main__":
    key = jax.random.PRNGKey(0)
    k_in, k_aug, k_noise, k_eps, k_par = jax.random.split(key, 5)

    N, T = 2, 8
    input_size = NUM_JOINTS * 3  # 48

    inputs_3d = jax.random.normal(k_in, (N, 1, T, NUM_JOINTS, 3), jnp.float32)
    augx = jax.random.normal(k_aug, (N, T, NUM_JOINTS, 3), jnp.float32)
    noise = jax.random.normal(k_noise, (N, NOISE_CH), jnp.float32)
    axis_eps = jax.random.normal(k_eps, (N, 3), jnp.float32)
    params = init_params(k_par, input_size)

    fwd = jax.jit(rt_generator_forward)
    augx_r, (r, _zero) = fwd(inputs_3d, augx, params, noise, axis_eps)
    jax.block_until_ready((augx_r, r))

    assert augx_r.shape == (N, T, NUM_JOINTS, 3)
    assert r.shape == (N, LINEAR_SIZE)
    assert bool(jnp.all(jnp.isfinite(augx_r))) and bool(jnp.all(jnp.isfinite(r)))

    # Rotation-stage check: rebuild the rotation in plain JAX from the kernel-produced
    # r (same f32 head math, so bf16 MXU differences in the MLP do not enter).
    r_axis = r[:, :3] + (r[:, 3:6] ** 2) * axis_eps
    n2 = jnp.sum(r_axis * r_axis, axis=-1, keepdims=True)
    kv = r_axis * jax.lax.rsqrt(jnp.maximum(n2, 1e-24))
    th = r[:, 6]
    c, s = jnp.cos(th), jnp.sin(th)
    kx, ky, kz = kv[:, 0], kv[:, 1], kv[:, 2]
    tt = 1.0 - c
    Rm = jnp.stack([
        jnp.stack([c + kx * kx * tt, kx * ky * tt - kz * s, kx * kz * tt + ky * s], -1),
        jnp.stack([ky * kx * tt + kz * s, c + ky * ky * tt, ky * kz * tt - kx * s], -1),
        jnp.stack([kz * kx * tt - ky * s, kz * ky * tt + kx * s, c + kz * kz * tt], -1),
    ], axis=-2)                                           # (N, 3, 3)
    ref = jnp.einsum("nij,ntkj->ntki", Rm, augx)
    err = float(jnp.max(jnp.abs(augx_r - ref)))
    assert err < 2e-2, f"rotation mismatch, max abs err = {err}"

    print("KERNEL_OK")
</pallas_src>

<mosaic_0001>
module attributes {stable_mosaic.version = 11 : i64} {
  func.func @_mlp_head_kernel(%arg0: memref<2x128xf32, #tpu.memory_space<vmem>>, %arg1: memref<2x3xf32, #tpu.memory_space<vmem>>, %arg2: memref<128x256xbf16, #tpu.memory_space<vmem>>, %arg3: memref<1x256xf32, #tpu.memory_space<vmem>>, %arg4: memref<1x256xf32, #tpu.memory_space<vmem>>, %arg5: memref<4x256x256xbf16, #tpu.memory_space<vmem>>, %arg6: memref<4x1x256xf32, #tpu.memory_space<vmem>>, %arg7: memref<4x1x256xf32, #tpu.memory_space<vmem>>, %arg8: memref<2x256xf32, #tpu.memory_space<vmem>>, %arg9: memref<2x4xf32, #tpu.memory_space<vmem>>) attributes {dimension_semantics = [], scalar_prefetch = 0 : i64, scratch_operands = 0 : i64, tpu.core_type = #tpu.core_type<tc>} {
    %c0 = arith.constant 0 : index
    %c0_0 = arith.constant 0 : index
    %0 = vector.load %arg0[%c0, %c0_0] : memref<2x128xf32, #tpu.memory_space<vmem>>, vector<2x128xf32>
    %1 = arith.truncf %0 : vector<2x128xf32> to vector<2x128xbf16>
    %c0_1 = arith.constant 0 : index
    %c0_2 = arith.constant 0 : index
    %2 = vector.load %arg2[%c0_1, %c0_2] : memref<128x256xbf16, #tpu.memory_space<vmem>>, vector<128x256xbf16>
    %cst = arith.constant dense<0.000000e+00> : vector<2x256xf32>
    %3 = tpu.matmul %1, %2, %cst {dimension_numbers = #tpu.dot_dimension_numbers<[1], [0], [0], [1], [0, 0, 1, 1], [], []>} : vector<2x128xbf16>, vector<128x256xbf16>, vector<2x256xf32> -> vector<2x256xf32>
    %c0_3 = arith.constant 0 : index
    %c0_4 = arith.constant 0 : index
    %4 = vector.load %arg3[%c0_3, %c0_4] : memref<1x256xf32, #tpu.memory_space<vmem>>, vector<1x256xf32>
    %c0_5 = arith.constant 0 : index
    %c0_6 = arith.constant 0 : index
    %5 = vector.load %arg4[%c0_5, %c0_6] : memref<1x256xf32, #tpu.memory_space<vmem>>, vector<1x256xf32>
    %cst_7 = arith.constant dense<0.000000e+00> : vector<256xf32>
    %6 = vector.multi_reduction <add>, %3, %cst_7 [0] : vector<2x256xf32> to vector<256xf32>
    %7 = vector.shape_cast %6 : vector<256xf32> to vector<1x256xf32>
    %cst_8 = arith.constant 2.000000e+00 : f32
    %8 = vector.broadcast %cst_8 : f32 to vector<1x256xf32>
    %9 = arith.divf %7, %8 : vector<1x256xf32>
    %10 = vector.broadcast %9 : vector<1x256xf32> to vector<2x256xf32>
    %11 = arith.subf %3, %10 : vector<2x256xf32>
    %12 = arith.mulf %11, %11 : vector<2x256xf32>
    %cst_9 = arith.constant dense<0.000000e+00> : vector<256xf32>
    %13 = vector.multi_reduction <add>, %12, %cst_9 [0] : vector<2x256xf32> to vector<256xf32>
    %14 = vector.shape_cast %13 : vector<256xf32> to vector<1x256xf32>
    %cst_10 = arith.constant 2.000000e+00 : f32
    %15 = vector.broadcast %cst_10 : f32 to vector<1x256xf32>
    %16 = arith.divf %14, %15 : vector<1x256xf32>
    %17 = vector.broadcast %9 : vector<1x256xf32> to vector<2x256xf32>
    %18 = arith.subf %3, %17 : vector<2x256xf32>
    %cst_11 = arith.constant 9.99999974E-6 : f32
    %19 = vector.broadcast %cst_11 : f32 to vector<1x256xf32>
    %20 = arith.addf %16, %19 : vector<1x256xf32>
    %21 = math.rsqrt %20 : vector<1x256xf32>
    %22 = vector.broadcast %21 : vector<1x256xf32> to vector<2x256xf32>
    %23 = arith.mulf %18, %22 : vector<2x256xf32>
    %24 = vector.broadcast %4 : vector<1x256xf32> to vector<2x256xf32>
    %25 = arith.mulf %23, %24 : vector<2x256xf32>
    %26 = vector.broadcast %5 : vector<1x256xf32> to vector<2x256xf32>
    %27 = arith.addf %25, %26 : vector<2x256xf32>
    %cst_12 = arith.constant 0.000000e+00 : f32
    %28 = vector.broadcast %cst_12 : f32 to vector<2x256xf32>
    %29 = arith.cmpf oge, %27, %28 : vector<2x256xf32>
    %cst_13 = arith.constant 0.00999999977 : f32
    %30 = vector.broadcast %cst_13 : f32 to vector<2x256xf32>
    %31 = arith.mulf %30, %27 : vector<2x256xf32>
    %32 = arith.select %29, %27, %31 : vector<2x256xi1>, vector<2x256xf32>
    %33 = arith.truncf %32 : vector<2x256xf32> to vector<2x256xbf16>
    %c0_14 = arith.constant 0 : index
    %c0_15 = arith.constant 0 : index
    %c0_16 = arith.constant 0 : index
    %34 = vector.load %arg5[%c0_14, %c0_15, %c0_16] : memref<4x256x256xbf16, #tpu.memory_space<vmem>>, vector<1x256x256xbf16>
    %35 = vector.shape_cast %34 : vector<1x256x256xbf16> to vector<256x256xbf16>
    %cst_17 = arith.constant dense<0.000000e+00> : vector<2x256xf32>
    %36 = tpu.matmul %33, %35, %cst_17 {dimension_numbers = #tpu.dot_dimension_numbers<[1], [0], [0], [1], [0, 0, 1, 1], [], []>} : vector<2x256xbf16>, vector<256x256xbf16>, vector<2x256xf32> -> vector<2x256xf32>
    %c0_18 = arith.constant 0 : index
    %c0_19 = arith.constant 0 : index
    %c0_20 = arith.constant 0 : index
    %37 = vector.load %arg6[%c0_18, %c0_19, %c0_20] : memref<4x1x256xf32, #tpu.memory_space<vmem>>, vector<1x1x256xf32>
    %38 = vector.shape_cast %37 : vector<1x1x256xf32> to vector<1x256xf32>
    %c0_21 = arith.constant 0 : index
    %c0_22 = arith.constant 0 : index
    %c0_23 = arith.constant 0 : index
    %39 = vector.load %arg7[%c0_21, %c0_22, %c0_23] : memref<4x1x256xf32, #tpu.memory_space<vmem>>, vector<1x1x256xf32>
    %40 = vector.shape_cast %39 : vector<1x1x256xf32> to vector<1x256xf32>
    %cst_24 = arith.constant dense<0.000000e+00> : vector<256xf32>
    %41 = vector.multi_reduction <add>, %36, %cst_24 [0] : vector<2x256xf32> to vector<256xf32>
    %42 = vector.shape_cast %41 : vector<256xf32> to vector<1x256xf32>
    %cst_25 = arith.constant 2.000000e+00 : f32
    %43 = vector.broadcast %cst_25 : f32 to vector<1x256xf32>
    %44 = arith.divf %42, %43 : vector<1x256xf32>
    %45 = vector.broadcast %44 : vector<1x256xf32> to vector<2x256xf32>
    %46 = arith.subf %36, %45 : vector<2x256xf32>
    %47 = arith.mulf %46, %46 : vector<2x256xf32>
    %cst_26 = arith.constant dense<0.000000e+00> : vector<256xf32>
    %48 = vector.multi_reduction <add>, %47, %cst_26 [0] : vector<2x256xf32> to vector<256xf32>
    %49 = vector.shape_cast %48 : vector<256xf32> to vector<1x256xf32>
    %cst_27 = arith.constant 2.000000e+00 : f32
    %50 = vector.broadcast %cst_27 : f32 to vector<1x256xf32>
    %51 = arith.divf %49, %50 : vector<1x256xf32>
    %52 = vector.broadcast %44 : vector<1x256xf32> to vector<2x256xf32>
    %53 = arith.subf %36, %52 : vector<2x256xf32>
    %cst_28 = arith.constant 9.99999974E-6 : f32
    %54 = vector.broadcast %cst_28 : f32 to vector<1x256xf32>
    %55 = arith.addf %51, %54 : vector<1x256xf32>
    %56 = math.rsqrt %55 : vector<1x256xf32>
    %57 = vector.broadcast %56 : vector<1x256xf32> to vector<2x256xf32>
    %58 = arith.mulf %53, %57 : vector<2x256xf32>
    %59 = vector.broadcast %38 : vector<1x256xf32> to vector<2x256xf32>
    %60 = arith.mulf %58, %59 : vector<2x256xf32>
    %61 = vector.broadcast %40 : vector<1x256xf32> to vector<2x256xf32>
    %62 = arith.addf %60, %61 : vector<2x256xf32>
    %cst_29 = arith.constant 0.000000e+00 : f32
    %63 = vector.broadcast %cst_29 : f32 to vector<2x256xf32>
    %64 = arith.cmpf oge, %62, %63 : vector<2x256xf32>
    %cst_30 = arith.constant 0.00999999977 : f32
    %65 = vector.broadcast %cst_30 : f32 to vector<2x256xf32>
    %66 = arith.mulf %65, %62 : vector<2x256xf32>
    %67 = arith.select %64, %62, %66 : vector<2x256xi1>, vector<2x256xf32>
    %68 = arith.truncf %67 : vector<2x256xf32> to vector<2x256xbf16>
    %c1 = arith.constant 1 : index
    %c0_31 = arith.constant 0 : index
    %c0_32 = arith.constant 0 : index
    %69 = vector.load %arg5[%c1, %c0_31, %c0_32] : memref<4x256x256xbf16, #tpu.memory_space<vmem>>, vector<1x256x256xbf16>
    %70 = vector.shape_cast %69 : vector<1x256x256xbf16> to vector<256x256xbf16>
    %cst_33 = arith.constant dense<0.000000e+00> : vector<2x256xf32>
    %71 = tpu.matmul %68, %70, %cst_33 {dimension_numbers = #tpu.dot_dimension_numbers<[1], [0], [0], [1], [0, 0, 1, 1], [], []>} : vector<2x256xbf16>, vector<256x256xbf16>, vector<2x256xf32> -> vector<2x256xf32>
    %c1_34 = arith.constant 1 : index
    %c0_35 = arith.constant 0 : index
    %c0_36 = arith.constant 0 : index
    %72 = vector.load %arg6[%c1_34, %c0_35, %c0_36] : memref<4x1x256xf32, #tpu.memory_space<vmem>>, vector<1x1x256xf32>
    %73 = vector.shape_cast %72 : vector<1x1x256xf32> to vector<1x256xf32>
    %c1_37 = arith.constant 1 : index
    %c0_38 = arith.constant 0 : index
    %c0_39 = arith.constant 0 : index
    %74 = vector.load %arg7[%c1_37, %c0_38, %c0_39] : memref<4x1x256xf32, #tpu.memory_space<vmem>>, vector<1x1x256xf32>
    %75 = vector.shape_cast %74 : vector<1x1x256xf32> to vector<1x256xf32>
    %cst_40 = arith.constant dense<0.000000e+00> : vector<256xf32>
    %76 = vector.multi_reduction <add>, %71, %cst_40 [0] : vector<2x256xf32> to vector<256xf32>
    %77 = vector.shape_cast %76 : vector<256xf32> to vector<1x256xf32>
    %cst_41 = arith.constant 2.000000e+00 : f32
    %78 = vector.broadcast %cst_41 : f32 to vector<1x256xf32>
    %79 = arith.divf %77, %78 : vector<1x256xf32>
    %80 = vector.broadcast %79 : vector<1x256xf32> to vector<2x256xf32>
    %81 = arith.subf %71, %80 : vector<2x256xf32>
    %82 = arith.mulf %81, %81 : vector<2x256xf32>
    %cst_42 = arith.constant dense<0.000000e+00> : vector<256xf32>
    %83 = vector.multi_reduction <add>, %82, %cst_42 [0] : vector<2x256xf32> to vector<256xf32>
    %84 = vector.shape_cast %83 : vector<256xf32> to vector<1x256xf32>
    %cst_43 = arith.constant 2.000000e+00 : f32
    %85 = vector.broadcast %cst_43 : f32 to vector<1x256xf32>
    %86 = arith.divf %84, %85 : vector<1x256xf32>
    %87 = vector.broadcast %79 : vector<1x256xf32> to vector<2x256xf32>
    %88 = arith.subf %71, %87 : vector<2x256xf32>
    %cst_44 = arith.constant 9.99999974E-6 : f32
    %89 = vector.broadcast %cst_44 : f32 to vector<1x256xf32>
    %90 = arith.addf %86, %89 : vector<1x256xf32>
    %91 = math.rsqrt %90 : vector<1x256xf32>
    %92 = vector.broadcast %91 : vector<1x256xf32> to vector<2x256xf32>
    %93 = arith.mulf %88, %92 : vector<2x256xf32>
    %94 = vector.broadcast %73 : vector<1x256xf32> to vector<2x256xf32>
    %95 = arith.mulf %93, %94 : vector<2x256xf32>
    %96 = vector.broadcast %75 : vector<1x256xf32> to vector<2x256xf32>
    %97 = arith.addf %95, %96 : vector<2x256xf32>
    %cst_45 = arith.constant 0.000000e+00 : f32
    %98 = vector.broadcast %cst_45 : f32 to vector<2x256xf32>
    %99 = arith.cmpf oge, %97, %98 : vector<2x256xf32>
    %cst_46 = arith.constant 0.00999999977 : f32
    %100 = vector.broadcast %cst_46 : f32 to vector<2x256xf32>
    %101 = arith.mulf %100, %97 : vector<2x256xf32>
    %102 = arith.select %99, %97, %101 : vector<2x256xi1>, vector<2x256xf32>
    %103 = arith.truncf %102 : vector<2x256xf32> to vector<2x256xbf16>
    %c2 = arith.constant 2 : index
    %c0_47 = arith.constant 0 : index
    %c0_48 = arith.constant 0 : index
    %104 = vector.load %arg5[%c2, %c0_47, %c0_48] : memref<4x256x256xbf16, #tpu.memory_space<vmem>>, vector<1x256x256xbf16>
    %105 = vector.shape_cast %104 : vector<1x256x256xbf16> to vector<256x256xbf16>
    %cst_49 = arith.constant dense<0.000000e+00> : vector<2x256xf32>
    %106 = tpu.matmul %103, %105, %cst_49 {dimension_numbers = #tpu.dot_dimension_numbers<[1], [0], [0], [1], [0, 0, 1, 1], [], []>} : vector<2x256xbf16>, vector<256x256xbf16>, vector<2x256xf32> -> vector<2x256xf32>
    %c2_50 = arith.constant 2 : index
    %c0_51 = arith.constant 0 : index
    %c0_52 = arith.constant 0 : index
    %107 = vector.load %arg6[%c2_50, %c0_51, %c0_52] : memref<4x1x256xf32, #tpu.memory_space<vmem>>, vector<1x1x256xf32>
    %108 = vector.shape_cast %107 : vector<1x1x256xf32> to vector<1x256xf32>
    %c2_53 = arith.constant 2 : index
    %c0_54 = arith.constant 0 : index
    %c0_55 = arith.constant 0 : index
    %109 = vector.load %arg7[%c2_53, %c0_54, %c0_55] : memref<4x1x256xf32, #tpu.memory_space<vmem>>, vector<1x1x256xf32>
    %110 = vector.shape_cast %109 : vector<1x1x256xf32> to vector<1x256xf32>
    %cst_56 = arith.constant dense<0.000000e+00> : vector<256xf32>
    %111 = vector.multi_reduction <add>, %106, %cst_56 [0] : vector<2x256xf32> to vector<256xf32>
    %112 = vector.shape_cast %111 : vector<256xf32> to vector<1x256xf32>
    %cst_57 = arith.constant 2.000000e+00 : f32
    %113 = vector.broadcast %cst_57 : f32 to vector<1x256xf32>
    %114 = arith.divf %112, %113 : vector<1x256xf32>
    %115 = vector.broadcast %114 : vector<1x256xf32> to vector<2x256xf32>
    %116 = arith.subf %106, %115 : vector<2x256xf32>
    %117 = arith.mulf %116, %116 : vector<2x256xf32>
    %cst_58 = arith.constant dense<0.000000e+00> : vector<256xf32>
    %118 = vector.multi_reduction <add>, %117, %cst_58 [0] : vector<2x256xf32> to vector<256xf32>
    %119 = vector.shape_cast %118 : vector<256xf32> to vector<1x256xf32>
    %cst_59 = arith.constant 2.000000e+00 : f32
    %120 = vector.broadcast %cst_59 : f32 to vector<1x256xf32>
    %121 = arith.divf %119, %120 : vector<1x256xf32>
    %122 = vector.broadcast %114 : vector<1x256xf32> to vector<2x256xf32>
    %123 = arith.subf %106, %122 : vector<2x256xf32>
    %cst_60 = arith.constant 9.99999974E-6 : f32
    %124 = vector.broadcast %cst_60 : f32 to vector<1x256xf32>
    %125 = arith.addf %121, %124 : vector<1x256xf32>
    %126 = math.rsqrt %125 : vector<1x256xf32>
    %127 = vector.broadcast %126 : vector<1x256xf32> to vector<2x256xf32>
    %128 = arith.mulf %123, %127 : vector<2x256xf32>
    %129 = vector.broadcast %108 : vector<1x256xf32> to vector<2x256xf32>
    %130 = arith.mulf %128, %129 : vector<2x256xf32>
    %131 = vector.broadcast %110 : vector<1x256xf32> to vector<2x256xf32>
    %132 = arith.addf %130, %131 : vector<2x256xf32>
    %cst_61 = arith.constant 0.000000e+00 : f32
    %133 = vector.broadcast %cst_61 : f32 to vector<2x256xf32>
    %134 = arith.cmpf oge, %132, %133 : vector<2x256xf32>
    %cst_62 = arith.constant 0.00999999977 : f32
    %135 = vector.broadcast %cst_62 : f32 to vector<2x256xf32>
    %136 = arith.mulf %135, %132 : vector<2x256xf32>
    %137 = arith.select %134, %132, %136 : vector<2x256xi1>, vector<2x256xf32>
    %138 = arith.truncf %137 : vector<2x256xf32> to vector<2x256xbf16>
    %c3 = arith.constant 3 : index
    %c0_63 = arith.constant 0 : index
    %c0_64 = arith.constant 0 : index
    %139 = vector.load %arg5[%c3, %c0_63, %c0_64] : memref<4x256x256xbf16, #tpu.memory_space<vmem>>, vector<1x256x256xbf16>
    %140 = vector.shape_cast %139 : vector<1x256x256xbf16> to vector<256x256xbf16>
    %cst_65 = arith.constant dense<0.000000e+00> : vector<2x256xf32>
    %141 = tpu.matmul %138, %140, %cst_65 {dimension_numbers = #tpu.dot_dimension_numbers<[1], [0], [0], [1], [0, 0, 1, 1], [], []>} : vector<2x256xbf16>, vector<256x256xbf16>, vector<2x256xf32> -> vector<2x256xf32>
    %c3_66 = arith.constant 3 : index
    %c0_67 = arith.constant 0 : index
    %c0_68 = arith.constant 0 : index
    %142 = vector.load %arg6[%c3_66, %c0_67, %c0_68] : memref<4x1x256xf32, #tpu.memory_space<vmem>>, vector<1x1x256xf32>
    %143 = vector.shape_cast %142 : vector<1x1x256xf32> to vector<1x256xf32>
    %c3_69 = arith.constant 3 : index
    %c0_70 = arith.constant 0 : index
    %c0_71 = arith.constant 0 : index
    %144 = vector.load %arg7[%c3_69, %c0_70, %c0_71] : memref<4x1x256xf32, #tpu.memory_space<vmem>>, vector<1x1x256xf32>
    %145 = vector.shape_cast %144 : vector<1x1x256xf32> to vector<1x256xf32>
    %cst_72 = arith.constant dense<0.000000e+00> : vector<256xf32>
    %146 = vector.multi_reduction <add>, %141, %cst_72 [0] : vector<2x256xf32> to vector<256xf32>
    %147 = vector.shape_cast %146 : vector<256xf32> to vector<1x256xf32>
    %cst_73 = arith.constant 2.000000e+00 : f32
    %148 = vector.broadcast %cst_73 : f32 to vector<1x256xf32>
    %149 = arith.divf %147, %148 : vector<1x256xf32>
    %150 = vector.broadcast %149 : vector<1x256xf32> to vector<2x256xf32>
    %151 = arith.subf %141, %150 : vector<2x256xf32>
    %152 = arith.mulf %151, %151 : vector<2x256xf32>
    %cst_74 = arith.constant dense<0.000000e+00> : vector<256xf32>
    %153 = vector.multi_reduction <add>, %152, %cst_74 [0] : vector<2x256xf32> to vector<256xf32>
    %154 = vector.shape_cast %153 : vector<256xf32> to vector<1x256xf32>
    %cst_75 = arith.constant 2.000000e+00 : f32
    %155 = vector.broadcast %cst_75 : f32 to vector<1x256xf32>
    %156 = arith.divf %154, %155 : vector<1x256xf32>
    %157 = vector.broadcast %149 : vector<1x256xf32> to vector<2x256xf32>
    %158 = arith.subf %141, %157 : vector<2x256xf32>
    %cst_76 = arith.constant 9.99999974E-6 : f32
    %159 = vector.broadcast %cst_76 : f32 to vector<1x256xf32>
    %160 = arith.addf %156, %159 : vector<1x256xf32>
    %161 = math.rsqrt %160 : vector<1x256xf32>
    %162 = vector.broadcast %161 : vector<1x256xf32> to vector<2x256xf32>
    %163 = arith.mulf %158, %162 : vector<2x256xf32>
    %164 = vector.broadcast %143 : vector<1x256xf32> to vector<2x256xf32>
    %165 = arith.mulf %163, %164 : vector<2x256xf32>
    %166 = vector.broadcast %145 : vector<1x256xf32> to vector<2x256xf32>
    %167 = arith.addf %165, %166 : vector<2x256xf32>
    %cst_77 = arith.constant 0.000000e+00 : f32
    %168 = vector.broadcast %cst_77 : f32 to vector<2x256xf32>
    %169 = arith.cmpf oge, %167, %168 : vector<2x256xf32>
    %cst_78 = arith.constant 0.00999999977 : f32
    %170 = vector.broadcast %cst_78 : f32 to vector<2x256xf32>
    %171 = arith.mulf %170, %167 : vector<2x256xf32>
    %172 = arith.select %169, %167, %171 : vector<2x256xi1>, vector<2x256xf32>
    %c0_79 = arith.constant 0 : index
    %c0_80 = arith.constant 0 : index
    %173 = vector.load %arg8[%c0_79, %c0_80] : memref<2x256xf32, #tpu.memory_space<vmem>>, vector<2x256xf32>
    tpu.vector_store %arg8[%c0_79, %c0_80], %172 {strides = array<i32>} : memref<2x256xf32, #tpu.memory_space<vmem>>, vector<2x256xf32>,
    %174 = vector.extract_strided_slice %172 {offsets = [0, 0], sizes = [2, 3], strides = [1, 1]} : vector<2x256xf32> to vector<2x3xf32>
    %175 = vector.extract_strided_slice %172 {offsets = [0, 3], sizes = [2, 3], strides = [1, 1]} : vector<2x256xf32> to vector<2x3xf32>
    %176 = vector.extract_strided_slice %172 {offsets = [0, 3], sizes = [2, 3], strides = [1, 1]} : vector<2x256xf32> to vector<2x3xf32>
    %177 = arith.mulf %175, %176 : vector<2x3xf32>
    %c0_81 = arith.constant 0 : index
    %c0_82 = arith.constant 0 : index
    %178 = vector.load %arg1[%c0_81, %c0_82] : memref<2x3xf32, #tpu.memory_space<vmem>>, vector<2x3xf32>
    %179 = arith.mulf %177, %178 : vector<2x3xf32>
    %180 = arith.addf %174, %179 : vector<2x3xf32>
    %181 = arith.mulf %180, %180 : vector<2x3xf32>
    %cst_83 = arith.constant dense<0.000000e+00> : vector<2xf32>
    %182 = vector.multi_reduction <add>, %181, %cst_83 [1] : vector<2x3xf32> to vector<2xf32>
    %183 = vector.shape_cast %182 : vector<2xf32> to vector<2x1xf32>
    %cst_84 = arith.constant 1.000000e-24 : f32
    %184 = vector.broadcast %cst_84 : f32 to vector<2x1xf32>
    %185 = arith.maximumf %183, %184 : vector<2x1xf32>
    %186 = math.rsqrt %185 : vector<2x1xf32>
    %187 = vector.broadcast %186 : vector<2x1xf32> to vector<2x3xf32>
    %188 = arith.mulf %180, %187 : vector<2x3xf32>
    %c0_85 = arith.constant 0 : index
    %c0_86 = arith.constant 0 : index
    %189 = vector.load %arg9[%c0_85, %c0_86] : memref<2x4xf32, #tpu.memory_space<vmem>>, vector<2x3xf32>
    tpu.vector_store %arg9[%c0_85, %c0_86], %188 {strides = array<i32>} : memref<2x4xf32, #tpu.memory_space<vmem>>, vector<2x3xf32>,
    %190 = vector.extract_strided_slice %172 {offsets = [0, 6], sizes = [2, 1], strides = [1, 1]} : vector<2x256xf32> to vector<2x1xf32>
    %c0_87 = arith.constant 0 : index
    %c3_88 = arith.constant 3 : index
    %191 = vector.load %arg9[%c0_87, %c3_88] : memref<2x4xf32, #tpu.memory_space<vmem>>, vector<2x1xf32>
    tpu.vector_store %arg9[%c0_87, %c3_88], %190 {strides = array<i32>} : memref<2x4xf32, #tpu.memory_space<vmem>>, vector<2x1xf32>,
    return
  }
}

module attributes {stable_mosaic.version = 11 : i64} {
  func.func @_rot_kernel(%arg0: i32, %arg1: i32, %arg2: memref<10xf32, #tpu.memory_space<smem>>, %arg3: memref<1x1x384xf32, #tpu.memory_space<vmem>>, %arg4: memref<1x1x384xf32, #tpu.memory_space<vmem>>) attributes {dimension_semantics = [#tpu.dimension_semantics<parallel>, #tpu.dimension_semantics<parallel>], iteration_bounds = array<i64: 2, 1>, scalar_prefetch = 0 : i64, scratch_operands = 0 : i64, tpu.core_type = #tpu.core_type<tc>, window_params = [{transform_indices = @transform_0, window_bounds = array<i64: 10>}, {transform_indices = @transform_1, window_bounds = array<i64: 1, 1, 384>}, {transform_indices = @transform_2, window_bounds = array<i64: 1, 1, 384>}]} {
    %c5_i32 = arith.constant 5 : i32
    %0 = arith.muli %arg0, %c5_i32 : i32
    %c0_i32 = arith.constant 0 : i32
    %1 = arith.addi %0, %c0_i32 : i32
    %2 = arith.index_cast %1 : i32 to index
    %3 = memref.load %arg2[%2] : memref<10xf32, #tpu.memory_space<smem>>
    %c5_i32_0 = arith.constant 5 : i32
    %4 = arith.muli %arg0, %c5_i32_0 : i32
    %c1_i32 = arith.constant 1 : i32
    %5 = arith.addi %4, %c1_i32 : i32
    %6 = arith.index_cast %5 : i32 to index
    %7 = memref.load %arg2[%6] : memref<10xf32, #tpu.memory_space<smem>>
    %c5_i32_1 = arith.constant 5 : i32
    %8 = arith.muli %arg0, %c5_i32_1 : i32
    %c2_i32 = arith.constant 2 : i32
    %9 = arith.addi %8, %c2_i32 : i32
    %10 = arith.index_cast %9 : i32 to index
    %11 = memref.load %arg2[%10] : memref<10xf32, #tpu.memory_space<smem>>
    %c5_i32_2 = arith.constant 5 : i32
    %12 = arith.muli %arg0, %c5_i32_2 : i32
    %c3_i32 = arith.constant 3 : i32
    %13 = arith.addi %12, %c3_i32 : i32
    %14 = arith.index_cast %13 : i32 to index
    %15 = memref.load %arg2[%14] : memref<10xf32, #tpu.memory_space<smem>>
    %c5_i32_3 = arith.constant 5 : i32
    %16 = arith.muli %arg0, %c5_i32_3 : i32
    %c4_i32 = arith.constant 4 : i32
    %17 = arith.addi %16, %c4_i32 : i32
    %18 = arith.index_cast %17 : i32 to index
    %19 = memref.load %arg2[%18] : memref<10xf32, #tpu.memory_space<smem>>
    %cst = arith.constant 1.000000e+00 : f32
    %20 = arith.subf %cst, %15 : f32
    %21 = arith.mulf %3, %3 : f32
    %22 = arith.mulf %21, %20 : f32
    %23 = arith.addf %15, %22 : f32
    %24 = arith.mulf %3, %7 : f32
    %25 = arith.mulf %24, %20 : f32
    %26 = arith.mulf %11, %19 : f32
    %27 = arith.subf %25, %26 : f32
    %28 = arith.mulf %3, %11 : f32
    %29 = arith.mulf %28, %20 : f32
    %30 = arith.mulf %7, %19 : f32
    %31 = arith.addf %29, %30 : f32
    %32 = arith.mulf %7, %3 : f32
    %33 = arith.mulf %32, %20 : f32
    %34 = arith.mulf %11, %19 : f32
    %35 = arith.addf %33, %34 : f32
    %36 = arith.mulf %7, %7 : f32
    %37 = arith.mulf %36, %20 : f32
    %38 = arith.addf %15, %37 : f32
    %39 = arith.mulf %7, %11 : f32
    %40 = arith.mulf %39, %20 : f32
    %41 = arith.mulf %3, %19 : f32
    %42 = arith.subf %40, %41 : f32
    %43 = arith.mulf %11, %3 : f32
    %44 = arith.mulf %43, %20 : f32
    %45 = arith.mulf %7, %19 : f32
    %46 = arith.subf %44, %45 : f32
    %47 = arith.mulf %11, %7 : f32
    %48 = arith.mulf %47, %20 : f32
    %49 = arith.mulf %3, %19 : f32
    %50 = arith.addf %48, %49 : f32
    %51 = arith.mulf %11, %11 : f32
    %52 = arith.mulf %51, %20 : f32
    %53 = arith.addf %15, %52 : f32
    %54 = tpu.iota {dimensions = array<i32: 1>} : vector<1x384xi32>
    %55 = arith.sitofp %54 : vector<1x384xi32> to vector<1x384xf32>
    %cst_4 = arith.constant 3.000000e+00 : f32
    %56 = vector.broadcast %cst_4 : f32 to vector<1x384xf32>
    %57 = arith.divf %55, %56 : vector<1x384xf32>
    %58 = math.floor %57 : vector<1x384xf32>
    %cst_5 = arith.constant 3.000000e+00 : f32
    %59 = vector.broadcast %cst_5 : f32 to vector<1x384xf32>
    %60 = arith.mulf %59, %58 : vector<1x384xf32>
    %61 = arith.subf %55, %60 : vector<1x384xf32>
    %cst_6 = arith.constant 0.000000e+00 : f32
    %62 = vector.broadcast %cst_6 : f32 to vector<1x384xf32>
    %63 = arith.cmpf oeq, %61, %62 : vector<1x384xf32>
    %cst_7 = arith.constant 1.000000e+00 : f32
    %64 = vector.broadcast %cst_7 : f32 to vector<1x384xf32>
    %65 = arith.cmpf oeq, %61, %64 : vector<1x384xf32>
    %66 = vector.broadcast %35 : f32 to vector<1x384xf32>
    %67 = vector.broadcast %46 : f32 to vector<1x384xf32>
    %68 = arith.select %65, %66, %67 : vector<1x384xi1>, vector<1x384xf32>
    %69 = vector.broadcast %23 : f32 to vector<1x384xf32>
    %70 = arith.select %63, %69, %68 : vector<1x384xi1>, vector<1x384xf32>
    %cst_8 = arith.constant 0.000000e+00 : f32
    %71 = vector.broadcast %cst_8 : f32 to vector<1x384xf32>
    %72 = arith.cmpf oeq, %61, %71 : vector<1x384xf32>
    %cst_9 = arith.constant 1.000000e+00 : f32
    %73 = vector.broadcast %cst_9 : f32 to vector<1x384xf32>
    %74 = arith.cmpf oeq, %61, %73 : vector<1x384xf32>
    %75 = vector.broadcast %38 : f32 to vector<1x384xf32>
    %76 = vector.broadcast %50 : f32 to vector<1x384xf32>
    %77 = arith.select %74, %75, %76 : vector<1x384xi1>, vector<1x384xf32>
    %78 = vector.broadcast %27 : f32 to vector<1x384xf32>
    %79 = arith.select %72, %78, %77 : vector<1x384xi1>, vector<1x384xf32>
    %cst_10 = arith.constant 0.000000e+00 : f32
    %80 = vector.broadcast %cst_10 : f32 to vector<1x384xf32>
    %81 = arith.cmpf oeq, %61, %80 : vector<1x384xf32>
    %cst_11 = arith.constant 1.000000e+00 : f32
    %82 = vector.broadcast %cst_11 : f32 to vector<1x384xf32>
    %83 = arith.cmpf oeq, %61, %82 : vector<1x384xf32>
    %84 = vector.broadcast %42 : f32 to vector<1x384xf32>
    %85 = vector.broadcast %53 : f32 to vector<1x384xf32>
    %86 = arith.select %83, %84, %85 : vector<1x384xi1>, vector<1x384xf32>
    %87 = vector.broadcast %31 : f32 to vector<1x384xf32>
    %88 = arith.select %81, %87, %86 : vector<1x384xi1>, vector<1x384xf32>
    %c0 = arith.constant 0 : index
    %c0_12 = arith.constant 0 : index
    %c0_13 = arith.constant 0 : index
    %89 = vector.load %arg3[%c0, %c0_12, %c0_13] : memref<1x1x384xf32, #tpu.memory_space<vmem>>, vector<1x1x384xf32>
    %90 = vector.shape_cast %89 : vector<1x1x384xf32> to vector<1x384xf32>
    %cst_14 = arith.constant 3.000000e+00 : f32
    %91 = vector.broadcast %cst_14 : f32 to vector<1x384xf32>
    %92 = arith.divf %55, %91 : vector<1x384xf32>
    %93 = math.floor %92 : vector<1x384xf32>
    %cst_15 = arith.constant 3.000000e+00 : f32
    %94 = vector.broadcast %cst_15 : f32 to vector<1x384xf32>
    %95 = arith.mulf %94, %93 : vector<1x384xf32>
    %96 = arith.subf %55, %95 : vector<1x384xf32>
    %cst_16 = arith.constant 0.000000e+00 : f32
    %97 = vector.broadcast %cst_16 : f32 to vector<1x384xf32>
    %98 = arith.cmpf oeq, %96, %97 : vector<1x384xf32>
    %cst_17 = arith.constant 1.000000e+00 : f32
    %99 = vector.broadcast %cst_17 : f32 to vector<1x384xf32>
    %100 = arith.cmpf oeq, %96, %99 : vector<1x384xf32>
    %101 = arith.select %100, %79, %88 : vector<1x384xi1>, vector<1x384xf32>
    %102 = arith.select %98, %70, %101 : vector<1x384xi1>, vector<1x384xf32>
    %103 = arith.cmpf oeq, %93, %58 : vector<1x384xf32>
    %cst_18 = arith.constant 0.000000e+00 : f32
    %104 = vector.broadcast %cst_18 : f32 to vector<1x384xf32>
    %105 = arith.select %103, %102, %104 : vector<1x384xi1>, vector<1x384xf32>
    %106 = arith.mulf %105, %90 : vector<1x384xf32>
    %c1_i32_19 = arith.constant 1 : i32
    %107 = tpu.dynamic_rotate %55 by %c1_i32_19 dim 1 : vector<1x384xf32>, i32 -> vector<1x384xf32>
    %c1_i32_20 = arith.constant 1 : i32
    %108 = tpu.dynamic_rotate %90 by %c1_i32_20 dim 1 : vector<1x384xf32>, i32 -> vector<1x384xf32>
    %cst_21 = arith.constant 3.000000e+00 : f32
    %109 = vector.broadcast %cst_21 : f32 to vector<1x384xf32>
    %110 = arith.divf %107, %109 : vector<1x384xf32>
    %111 = math.floor %110 : vector<1x384xf32>
    %cst_22 = arith.constant 3.000000e+00 : f32
    %112 = vector.broadcast %cst_22 : f32 to vector<1x384xf32>
    %113 = arith.mulf %112, %111 : vector<1x384xf32>
    %114 = arith.subf %107, %113 : vector<1x384xf32>
    %cst_23 = arith.constant 0.000000e+00 : f32
    %115 = vector.broadcast %cst_23 : f32 to vector<1x384xf32>
    %116 = arith.cmpf oeq, %114, %115 : vector<1x384xf32>
    %cst_24 = arith.constant 1.000000e+00 : f32
    %117 = vector.broadcast %cst_24 : f32 to vector<1x384xf32>
    %118 = arith.cmpf oeq, %114, %117 : vector<1x384xf32>
    %119 = arith.select %118, %79, %88 : vector<1x384xi1>, vector<1x384xf32>
    %120 = arith.select %116, %70, %119 : vector<1x384xi1>, vector<1x384xf32>
    %121 = arith.cmpf oeq, %111, %58 : vector<1x384xf32>
    %cst_25 = arith.constant 0.000000e+00 : f32
    %122 = vector.broadcast %cst_25 : f32 to vector<1x384xf32>
    %123 = arith.select %121, %120, %122 : vector<1x384xi1>, vector<1x384xf32>
    %124 = arith.mulf %123, %108 : vector<1x384xf32>
    %125 = arith.addf %106, %124 : vector<1x384xf32>
    %c2_i32_26 = arith.constant 2 : i32
    %126 = tpu.dynamic_rotate %55 by %c2_i32_26 dim 1 : vector<1x384xf32>, i32 -> vector<1x384xf32>
    %c2_i32_27 = arith.constant 2 : i32
    %127 = tpu.dynamic_rotate %90 by %c2_i32_27 dim 1 : vector<1x384xf32>, i32 -> vector<1x384xf32>
    %cst_28 = arith.constant 3.000000e+00 : f32
    %128 = vector.broadcast %cst_28 : f32 to vector<1x384xf32>
    %129 = arith.divf %126, %128 : vector<1x384xf32>
    %130 = math.floor %129 : vector<1x384xf32>
    %cst_29 = arith.constant 3.000000e+00 : f32
    %131 = vector.broadcast %cst_29 : f32 to vector<1x384xf32>
    %132 = arith.mulf %131, %130 : vector<1x384xf32>
    %133 = arith.subf %126, %132 : vector<1x384xf32>
    %cst_30 = arith.constant 0.000000e+00 : f32
    %134 = vector.broadcast %cst_30 : f32 to vector<1x384xf32>
    %135 = arith.cmpf oeq, %133, %134 : vector<1x384xf32>
    %cst_31 = arith.constant 1.000000e+00 : f32
    %136 = vector.broadcast %cst_31 : f32 to vector<1x384xf32>
    %137 = arith.cmpf oeq, %133, %136 : vector<1x384xf32>
    %138 = arith.select %137, %79, %88 : vector<1x384xi1>, vector<1x384xf32>
    %139 = arith.select %135, %70, %138 : vector<1x384xi1>, vector<1x384xf32>
    %140 = arith.cmpf oeq, %130, %58 : vector<1x384xf32>
    %cst_32 = arith.constant 0.000000e+00 : f32
    %141 = vector.broadcast %cst_32 : f32 to vector<1x384xf32>
    %142 = arith.select %140, %139, %141 : vector<1x384xi1>, vector<1x384xf32>
    %143 = arith.mulf %142, %127 : vector<1x384xf32>
    %144 = arith.addf %125, %143 : vector<1x384xf32>
    %c383_i32 = arith.constant 383 : i32
    %145 = tpu.dynamic_rotate %55 by %c383_i32 dim 1 : vector<1x384xf32>, i32 -> vector<1x384xf32>
    %c383_i32_33 = arith.constant 383 : i32
    %146 = tpu.dynamic_rotate %90 by %c383_i32_33 dim 1 : vector<1x384xf32>, i32 -> vector<1x384xf32>
    %cst_34 = arith.constant 3.000000e+00 : f32
    %147 = vector.broadcast %cst_34 : f32 to vector<1x384xf32>
    %148 = arith.divf %145, %147 : vector<1x384xf32>
    %149 = math.floor %148 : vector<1x384xf32>
    %cst_35 = arith.constant 3.000000e+00 : f32
    %150 = vector.broadcast %cst_35 : f32 to vector<1x384xf32>
    %151 = arith.mulf %150, %149 : vector<1x384xf32>
    %152 = arith.subf %145, %151 : vector<1x384xf32>
    %cst_36 = arith.constant 0.000000e+00 : f32
    %153 = vector.broadcast %cst_36 : f32 to vector<1x384xf32>
    %154 = arith.cmpf oeq, %152, %153 : vector<1x384xf32>
    %cst_37 = arith.constant 1.000000e+00 : f32
    %155 = vector.broadcast %cst_37 : f32 to vector<1x384xf32>
    %156 = arith.cmpf oeq, %152, %155 : vector<1x384xf32>
    %157 = arith.select %156, %79, %88 : vector<1x384xi1>, vector<1x384xf32>
    %158 = arith.select %154, %70, %157 : vector<1x384xi1>, vector<1x384xf32>
    %159 = arith.cmpf oeq, %149, %58 : vector<1x384xf32>
    %cst_38 = arith.constant 0.000000e+00 : f32
    %160 = vector.broadcast %cst_38 : f32 to vector<1x384xf32>
    %161 = arith.select %159, %158, %160 : vector<1x384xi1>, vector<1x384xf32>
    %162 = arith.mulf %161, %146 : vector<1x384xf32>
    %163 = arith.addf %144, %162 : vector<1x384xf32>
    %c382_i32 = arith.constant 382 : i32
    %164 = tpu.dynamic_rotate %55 by %c382_i32 dim 1 : vector<1x384xf32>, i32 -> vector<1x384xf32>
    %c382_i32_39 = arith.constant 382 : i32
    %165 = tpu.dynamic_rotate %90 by %c382_i32_39 dim 1 : vector<1x384xf32>, i32 -> vector<1x384xf32>
    %cst_40 = arith.constant 3.000000e+00 : f32
    %166 = vector.broadcast %cst_40 : f32 to vector<1x384xf32>
    %167 = arith.divf %164, %166 : vector<1x384xf32>
    %168 = math.floor %167 : vector<1x384xf32>
    %cst_41 = arith.constant 3.000000e+00 : f32
    %169 = vector.broadcast %cst_41 : f32 to vector<1x384xf32>
    %170 = arith.mulf %169, %168 : vector<1x384xf32>
    %171 = arith.subf %164, %170 : vector<1x384xf32>
    %cst_42 = arith.constant 0.000000e+00 : f32
    %172 = vector.broadcast %cst_42 : f32 to vector<1x384xf32>
    %173 = arith.cmpf oeq, %171, %172 : vector<1x384xf32>
    %cst_43 = arith.constant 1.000000e+00 : f32
    %174 = vector.broadcast %cst_43 : f32 to vector<1x384xf32>
    %175 = arith.cmpf oeq, %171, %174 : vector<1x384xf32>
    %176 = arith.select %175, %79, %88 : vector<1x384xi1>, vector<1x384xf32>
    %177 = arith.select %173, %70, %176 : vector<1x384xi1>, vector<1x384xf32>
    %178 = arith.cmpf oeq, %168, %58 : vector<1x384xf32>
    %cst_44 = arith.constant 0.000000e+00 : f32
    %179 = vector.broadcast %cst_44 : f32 to vector<1x384xf32>
    %180 = arith.select %178, %177, %179 : vector<1x384xi1>, vector<1x384xf32>
    %181 = arith.mulf %180, %165 : vector<1x384xf32>
    %182 = arith.addf %163, %181 : vector<1x384xf32>
    %c0_45 = arith.constant 0 : index
    %c0_46 = arith.constant 0 : index
    %c0_47 = arith.constant 0 : index
    %183 = vector.load %arg4[%c0_45, %c0_46, %c0_47] : memref<1x1x384xf32, #tpu.memory_space<vmem>>, vector<1x1x384xf32>
    %184 = vector.shape_cast %183 : vector<1x1x384xf32> to vector<1x384xf32>
    %185 = vector.shape_cast %182 : vector<1x384xf32> to vector<1x1x384xf32>
    tpu.vector_store %arg4[%c0_45, %c0_46, %c0_47], %185 {strides = array<i32>} : memref<1x1x384xf32, #tpu.memory_space<vmem>>, vector<1x1x384xf32>,
    return
  }
  func.func @transform_0(%arg0: i32, %arg1: i32) -> i32 {
    %c0_i32 = arith.constant 0 : i32
    %c0_i32_0 = arith.constant 0 : i32
    return %c0_i32 : i32
  }
  func.func @transform_1(%arg0: i32, %arg1: i32) -> (i32, i32, i32) {
    %c0_i32 = arith.constant 0 : i32
    %c0_i32_0 = arith.constant 0 : i32
    return %arg0, %arg1, %c0_i32 : i32, i32, i32
  }
  func.func @transform_2(%arg0: i32, %arg1: i32) -> (i32, i32, i32) {
    %c0_i32 = arith.constant 0 : i32
    %c0_i32_0 = arith.constant 0 : i32
    return %arg0, %arg1, %c0_i32 : i32, i32, i32
  }
}

</mosaic_0001>

<llo_original>
// kernel: sub.0
$region0: #{sub.0}
  #allocation0 [shape = 's32[1]{0}', space=sflag, size = 0x4, scoped, tag = 'scoped memory for sub.0']
  %s0 = inlined_call_operand.vmem [shape: f32[2,48], index: 0, kind: input, shape index: {}]
  %s1 = inlined_call_operand.vmem [shape: f32[2,48], index: 1, kind: input, shape index: {}]
  %s2 = inlined_call_operand.vmem [shape: f32[2,48], index: 2, kind: output, shape index: {}]
  %v3 = vld [vmem:[%s0] sm:$0x3]
  %v4 = vld [vmem:[%s1] sm:$0x3]
  %5 = xla_tuple %v3, %v4
  %6 = xla_tuple %5
  %v7 = vsub.f32 %v3, %v4
  %8 = xla_tuple %v7
  %9 = vst [vmem:[%s2] sm:$0x3] %v7

// kernel: rt_generator_forward.3
$region0: #{rt_generator_forward.3}
  #allocation0 [shape = 'u32[]', space=smem, size = 0x4, offset = 0x4, fixed_abs, tag = 'smem constant byte address 0x4 - core index']
  #allocation1 [shape = 'u32[144,128]{1,0:T(1,128)}', space=vmem, size = 0x12000, scoped, tag = 'internal scratch']
  %s0 = inlined_call_operand.vmem [shape: f32[10], index: 0, kind: input, shape index: {}]
  %s1 = inlined_call_operand.vmem [shape: f32[2,1,384], index: 1, kind: input, shape index: {}]
  %s2 = inlined_call_operand.vmem [shape: f32[2,1,384], index: 2, kind: output, shape index: {}]
  %s3 = sld [smem:[#allocation0]]
  $region45: #{rt_generator_forward.3} parent=0
    _
  %s5 = ssub.s32 1, %s3
  %s6 = scalar_select 0, %s5, %s3
  $region1: #{rt_generator_forward.3} parent=0
    #allocation2 [shape = 'u8[512]{0}', space=smem, size = 0x200, scoped, tag = 'input window, operand 0, single buffered']
    #allocation3 [shape = 's32[2]{0}', space=sflag, size = 0x8, scoped, tag = 'scoped memory for rt_generator_forward.3']
    %7 = vsyncpa [#allocation3], 0
    loop: start=0, step=1, limit=4
    $region2: #{rt_generator_forward.3} parent=1 // loop_pre_header
      _
    $region3: #{rt_generator_forward.3} parent=1 // loop_header
      %s9 = sphi 0, %s13
      %p10 = scmp.ge.s32.totalorder %s9, 4
      %s16 = sphi 0, %s28
      %s17 = sphi 0, %s24
      %s18 = sphi 0, %s16
      %s19 = sphi 0, %s17
      %s20 = sphi 0, %s18
      %s21 = sphi 0, %s19
      %s29 = sphi 0, %s29
      %s31 = sphi 0, %s29
      %s32 = sphi 0, %s31
      %s46 = sphi 0, %s32
      %s54 = sphi 0, %s56
      %s57 = sphi 0, %s54
      %s58 = sphi 0, %s57
      %s74 = sphi 0, %s58
      %s82 = sphi 0, %s84
      %s85 = sphi 0, %s82
      %s86 = sphi 0, %s85
      %s102 = sphi 0, %s86
    $region4: #{rt_generator_forward.3} parent=1 // loop_header_branch
      %12 = sbr.rel (%p10) target = $region8
    $region5: #{rt_generator_forward.3} parent=1 // loop_body
      %s14 = ssub.s32 %s9, 1
      %s15 = ssub.s32 %s9, 2
      %s22 = sadd.s32 1, %s17
      %p23 = scmp.ge.s32.totalorder %s22, 1
      %s24 = scalar_select %p23, 0, %s22
      %s25 = sadd.s32 1, %s16
      %s26 = scalar_select %p23, %s25, %s16
      %p27 = scmp.ge.s32.totalorder %s26, 2
      %s28 = scalar_select %p27, 0, %s26
      %s30 = sadd.s32 %s29, 1
      %p33 = scmp.eq.s32.totalorder %s9, 1
      %p34 = scmp.ne.s32.totalorder %s29, %s31
      %p35 = scmp.eq.s32.totalorder %s9, 0
      %p36 = por %p34, %p35
      %p37 = scmp.ne.s32.totalorder %s29, %s31
      %p38 = scmp.eq.s32.totalorder %s14, 1
      %p39 = por %p37, %p38
      %p40 = scmp.ne.s32.totalorder %s31, %s32
      %p41 = scmp.eq.s32.totalorder %s14, 0
      %p42 = por %p40, %p41
      %p43 = scmp.ne.s32.totalorder %s31, %s32
      %p44 = scmp.eq.s32.totalorder %s15, 1
      %p45 = por %p43, %p44
      %p47 = scmp.ne.s32.totalorder %s32, %s46
      %p48 = scmp.eq.s32.totalorder %s15, 0
      %p49 = por %p47, %p48
      %s50 = ssub.s32 %s16, %s28
      %s51 = ssub.s32 %s17, %s24
      %s52 = sor.u32 %s50, %s51
      %p53 = scmp.eq.s32.totalorder %s52, 0
      %s55 = sadd.s32 %s54, 1
      %s56 = scalar_select %p53, %s54, %s55
      %p59 = pneg %p53
      %p60 = scmp.eq.s32.totalorder %s9, 1
      %p61 = por %p59, %p60
      %p62 = scmp.ne.s32.totalorder %s54, %s57
      %p63 = scmp.eq.s32.totalorder %s9, 0
      %p64 = por %p62, %p63
      %p65 = scmp.ne.s32.totalorder %s54, %s57
      %p66 = scmp.eq.s32.totalorder %s14, 1
      %p67 = por %p65, %p66
      %p68 = scmp.ne.s32.totalorder %s57, %s58
      %p69 = scmp.eq.s32.totalorder %s14, 0
      %p70 = por %p68, %p69
      %p71 = scmp.ne.s32.totalorder %s57, %s58
      %p72 = scmp.eq.s32.totalorder %s15, 1
      %p73 = por %p71, %p72
      %p75 = scmp.ne.s32.totalorder %s58, %s74
      %p76 = scmp.eq.s32.totalorder %s15, 0
      %p77 = por %p75, %p76
      %s78 = ssub.s32 %s16, %s28
      %s79 = ssub.s32 %s17, %s24
      %s80 = sor.u32 %s78, %s79
      %p81 = scmp.eq.s32.totalorder %s80, 0
      %s83 = sadd.s32 %s82, 1
      %s84 = scalar_select %p81, %s82, %s83
      %p87 = pneg %p81
      %p88 = scmp.eq.s32.totalorder %s9, 1
      %p89 = por %p87, %p88
      %p90 = scmp.ne.s32.totalorder %s82, %s85
      %p91 = scmp.eq.s32.totalorder %s9, 0
      %p92 = por %p90, %p91
      %p93 = scmp.ne.s32.totalorder %s82, %s85
      %p94 = scmp.eq.s32.totalorder %s14, 1
      %p95 = por %p93, %p94
      %p96 = scmp.ne.s32.totalorder %s85, %s86
      %p97 = scmp.eq.s32.totalorder %s14, 0
      %p98 = por %p96, %p97
      %p99 = scmp.ne.s32.totalorder %s85, %s86
      %p100 = scmp.eq.s32.totalorder %s15, 1
      %p101 = por %p99, %p100
      %p103 = scmp.ne.s32.totalorder %s86, %s102
      %p104 = scmp.eq.s32.totalorder %s15, 0
      %p105 = por %p103, %p104
      %p106 = scmp.le.s32.totalorder 1, %s9
      %p107 = scmp.lt.s32.totalorder %s9, 3
      %p108 = pnand %p106, %p107
      %p109 = pneg %p108
      // Predicated region
      $region9: #{rt_generator_forward.3} parent=5 // pred_check
        _
      $region10: #{rt_generator_forward.3} parent=5 // pred_check_branch
        %111 = sbr.rel (%p108) target = $region12
      $region11: #{rt_generator_forward.3} parent=5 // pred_region
        %s112 = ssub.s32 %s9, 1
        // Predicated region
        $region13: #{rt_generator_forward.3} parent=11 // pred_check
          %p113 = pneg %p42
        $region14: #{rt_generator_forward.3} parent=11 // pred_check_branch
          %115 = sbr.rel (%p113) target = $region16
        $region15: #{rt_generator_forward.3} parent=11 // pred_region
          %s117 = ssub.s32 16, 16
          %118 = vsyncadd [#allocation3], %s117
          %s120 = sshll.u32 %s0, 4
          %s121 = int_to_ptr.vmem [resolvable:$true] %s120
          %123 = dma.vmem_to_smem %s121, 16, [#allocation2], [#allocation3]
        $region16: #{rt_generator_forward.3} parent=11 // pred_fallthru
          _
      $region12: #{rt_generator_forward.3} parent=5 // pred_fallthru
        _
      %p124 = scmp.lt.s32.totalorder %s9, 2
      // Predicated region
      $region17: #{rt_generator_forward.3} parent=5 // pred_check
        %p125 = pneg %p124
      $region18: #{rt_generator_forward.3} parent=5 // pred_check_branch
        %127 = sbr.rel (%p125) target = $region20
      $region19: #{rt_generator_forward.3} parent=5 // pred_region
        // Predicated region
        $region21: #{rt_generator_forward.3} parent=19 // pred_check
          %p128 = pneg %p64
        $region22: #{rt_generator_forward.3} parent=19 // pred_check_branch
          %130 = sbr.rel (%p128) target = $region24
        $region23: #{rt_generator_forward.3} parent=19 // pred_region
          %p131 = scmp.lt.s32.totalorder %s16, 1
          %s132 = scalar_select %p131, %s16, 1
          %p133 = scmp.lt.s32.totalorder %s17, 0
          %s134 = scalar_select %p133, %s17, 0
          %s135 = smul.addr %s134, 3
          %s136 = smul.addr %s132, 3
          %s137 = sadd.s32 %s135, %s136
          %s138 = scalar_lea.vmem %s1, %s137
        $region24: #{rt_generator_forward.3} parent=19 // pred_fallthru
          _
      $region20: #{rt_generator_forward.3} parent=5 // pred_fallthru
        _
      %p139 = scmp.le.s32.totalorder 1, %s9
      %p140 = scmp.lt.s32.totalorder %s9, 3
      %p141 = pnand %p139, %p140
      %p142 = pneg %p141
      // Predicated region
      $region25: #{rt_generator_forward.3} parent=5 // pred_check
        _
      $region26: #{rt_generator_forward.3} parent=5 // pred_check_branch
        %144 = sbr.rel (%p141) target = $region28
      $region27: #{rt_generator_forward.3} parent=5 // pred_region
        %s145 = ssub.s32 %s9, 1
        // Predicated region
        $region29: #{rt_generator_forward.3} parent=27 // pred_check
          %p146 = pneg %p42
        $region30: #{rt_generator_forward.3} parent=27 // pred_check_branch
          %148 = sbr.rel (%p146) target = $region32
        $region31: #{rt_generator_forward.3} parent=27 // pred_region
          %149 = dma.done [#allocation3], 16
        $region32: #{rt_generator_forward.3} parent=27 // pred_fallthru
          _
        %150 = sfence
        %p151 = pneg %p42
        %p152 = pneg %p39
        %p153 = scmp.lt.s32.totalorder %s18, 1
        %s154 = scalar_select %p153, %s18, 1
        %p155 = scmp.lt.s32.totalorder %s19, 0
        %s156 = scalar_select %p155, %s19, 0
        %s157 = smul.addr %s156, 3
        %s158 = smul.addr %s154, 3
        %s159 = sadd.s32 %s157, %s158
        %s160 = scalar_lea.vmem %s1, %s159
        %p161 = pneg %p70
        %p162 = pneg %p67
        %p163 = pneg %p98
        %p164 = pneg %p95
        %p165 = scmp.lt.s32.totalorder %s18, 1
        %s166 = scalar_select %p165, %s18, 1
        %p167 = scmp.lt.s32.totalorder %s19, 0
        %s168 = scalar_select %p167, %s19, 0
        %s169 = smul.addr %s168, 3
        %s170 = smul.addr %s166, 3
        %s171 = sadd.s32 %s169, %s170
        %s172 = scalar_lea.vmem %s2, %s171
        %p173 = scmp.lt.s32.totalorder %s18, 1
        %s174 = scalar_select %p173, %s18, 1
        %p175 = scmp.lt.s32.totalorder %s19, 0
        %s176 = scalar_select %p175, %s19, 0
        %s177 = smul.addr %s176, 3
        %s178 = smul.addr %s174, 3
        %s179 = sadd.s32 %s177, %s178
        %s180 = scalar_lea.vmem %s1, %s179
        %p181 = scmp.lt.s32.totalorder %s18, 1
        %s182 = scalar_select %p181, %s18, 1
        %p183 = scmp.lt.s32.totalorder %s19, 0
        %s184 = scalar_select %p183, %s19, 0
        %s185 = smul.addr %s184, 3
        %s186 = smul.addr %s182, 3
        %s187 = sadd.s32 %s185, %s186
        %s188 = scalar_lea.vmem %s2, %s187
        %s189 = smul.u32 %s18, 5
        %s190 = sld [smem:[#allocation2 + %s189]]
        %s191 = sadd.s32 %s189, 1
        %s192 = sld [smem:[#allocation2 + %s191]]
        %s193 = sadd.s32 %s189, 2
        %s194 = sld [smem:[#allocation2 + %s193]]
        %s195 = sadd.s32 %s189, 3
        %s196 = sld [smem:[#allocation2 + %s195]]
        %s197 = sadd.s32 %s189, 4
        %s198 = sld [smem:[#allocation2 + %s197]]
        %s199 = ssub.f32 1.0, %s196
        %s200 = smul.f32 %s190, %s190
        %s201 = smul.f32 %s200, %s199
        %s202 = sadd.f32 %s196, %s201
        %s203 = smul.f32 %s190, %s192
        %s204 = smul.f32 %s203, %s199
        %s205 = smul.f32 %s194, %s198
        %s206 = ssub.f32 %s204, %s205
        %s207 = smul.f32 %s190, %s194
        %s208 = smul.f32 %s207, %s199
        %s209 = smul.f32 %s192, %s198
        %s210 = sadd.f32 %s208, %s209
        %s211 = sadd.f32 %s204, %s205
        %s212 = smul.f32 %s192, %s192
        %s213 = smul.f32 %s212, %s199
        %s214 = sadd.f32 %s196, %s213
        %s215 = smul.f32 %s192, %s194
        %s216 = smul.f32 %s215, %s199
        %s217 = smul.f32 %s190, %s198
        %s218 = ssub.f32 %s216, %s217
        %s219 = ssub.f32 %s208, %s209
        %s220 = sadd.f32 %s216, %s217
        %s221 = smul.f32 %s194, %s194
        %s222 = smul.f32 %s221, %s199
        %s223 = sadd.f32 %s196, %s222
        %v224 = vlaneseq
        %v225 = vand.u32 %v224, 127
        %v226 = vadd.s32 %v225, 128
        %v227 = vadd.s32 %v225, 256
        %v228 = vcvt.s32.f32 %v225
        %v229 = vcvt.s32.f32 %v226
        %v230 = vcvt.s32.f32 %v227
        %v231 = vrcp.pop 3.0
        %v232 = vmul.f32 %v228, %v231
        %v233 = vmul.f32 %v229, %v231
        %v234 = vmul.f32 %v230, %v231
        %v235 = vfloor.f32 %v232
        %v236 = vfloor.f32 %v233
        %v237 = vfloor.f32 %v234
        %v238 = vmul.f32 %v235, 3.0
        %v239 = vmul.f32 %v236, 3.0
        %v240 = vmul.f32 %v237, 3.0
        %v241 = vsub.f32 %v228, %v238
        %v242 = vsub.f32 %v229, %v239
        %v243 = vsub.f32 %v230, %v240
        %vm244 = vcmp.eq.f32.partialorder %v241, 0.0
        %vm245 = vcmp.eq.f32.partialorder %v242, 0.0
        %vm246 = vcmp.eq.f32.partialorder %v243, 0.0
        %vm247 = vcmp.eq.f32.partialorder %v241, 1.0
        %vm248 = vcmp.eq.f32.partialorder %v242, 1.0
        %vm249 = vcmp.eq.f32.partialorder %v243, 1.0
        %v250 = vstv %s211
        %v251 = vstv %s219
        %v252 = vsel %vm247, %v250, %v251
        %v253 = vsel %vm248, %v250, %v251
        %v254 = vsel %vm249, %v250, %v251
        %v255 = vstv %s202
        %v256 = vsel %vm244, %v255, %v252
        %v257 = vsel %vm245, %v255, %v253
        %v258 = vsel %vm246, %v255, %v254
        %v259 = vstv %s214
        %v260 = vstv %s220
        %v261 = vsel %vm247, %v259, %v260
        %v262 = vsel %vm248, %v259, %v260
        %v263 = vsel %vm249, %v259, %v260
        %v264 = vstv %s206
        %v265 = vsel %vm244, %v264, %v261
        %v266 = vsel %vm245, %v264, %v262
        %v267 = vsel %vm246, %v264, %v263
        %v268 = vstv %s218
        %v269 = vstv %s223
        %v270 = vsel %vm247, %v268, %v269
        %v271 = vsel %vm248, %v268, %v269
        %v272 = vsel %vm249, %v268, %v269
        %v273 = vstv %s210
        %v274 = vsel %vm244, %v273, %v270
        %v275 = vsel %vm245, %v273, %v271
        %v276 = vsel %vm246, %v273, %v272
        %v277 = vld [vmem:[%s180] sm:$0x7]
        %v278 = vsel %vm247, %v265, %v274
        %v279 = vsel %vm248, %v266, %v275
        %v280 = vsel %vm249, %v267, %v276
        %v281 = vsel %vm244, %v255, %v278
        %v282 = vsel %vm245, %v255, %v279
        %v283 = vsel %vm246, %v255, %v280
        %vm284 = vcmp.eq.f32.partialorder %v235, %v235
        %vm285 = vcmp.eq.f32.partialorder %v236, %v236
        %vm286 = vcmp.eq.f32.partialorder %v237, %v237
        %v287 = vsel %vm284, %v281, 0.0
        %v288 = vsel %vm285, %v282, 0.0
        %v289 = vsel %vm286, %v283, 0.0
        %v291 = vlaneseq
        %v292 = vshrl.u32 %v291, 7
        %v293 = vsub.s32 0, %v292
        %v294 = vrot.slane %v277, %v293
        %v295 = vlaneseq
        %v296 = vshrl.u32 %v295, 7
        %v297 = vsub.s32 1, %v296
        %v298 = vrot.slane %v277, %v297
        %v299 = vlaneseq
        %v300 = vshrl.u32 %v299, 7
        %v301 = vsub.s32 2, %v300
        %v302 = vrot.slane %v277, %v301
        %v306 = vmul.f32 %v287, %v294
        %v307 = vmul.f32 %v288, %v298
        %v308 = vmul.f32 %v289, %v302
        %309 = vrot.lane.b32.xlu0 %v228, 1
        %v310 = vpop.permute.xlu0 %309
        %311 = vrot.lane.b32.xlu0 %v229, 1
        %v312 = vpop.permute.xlu0 %311
        %313 = vrot.lane.b32.xlu0 %v230, 1
        %v314 = vpop.permute.xlu0 %313
        %vm315 = vcmp.lt.s32.totalorder %v225, 1
        %v316 = vsel %vm315, %v312, %v314
        %v317 = vsel %vm315, %v310, %v312
        %v318 = vsel %vm315, %v314, %v310
        %319 = vrot.lane.b32.xlu0 %v294, 1
        %v320 = vpop.permute.xlu0 %319
        %321 = vrot.lane.b32.xlu0 %v298, 1
        %v322 = vpop.permute.xlu0 %321
        %323 = vrot.lane.b32.xlu0 %v302, 1
        %v324 = vpop.permute.xlu0 %323
        %v325 = vsel %vm315, %v322, %v324
        %v326 = vsel %vm315, %v320, %v322
        %v327 = vsel %vm315, %v324, %v320
        %v328 = vmul.f32 %v318, %v231
        %v329 = vmul.f32 %v317, %v231
        %v330 = vmul.f32 %v316, %v231
        %v331 = vfloor.f32 %v328
        %v332 = vfloor.f32 %v329
        %v333 = vfloor.f32 %v330
        %v334 = vmul.f32 %v331, 3.0
        %v335 = vmul.f32 %v332, 3.0
        %v336 = vmul.f32 %v333, 3.0
        %v337 = vsub.f32 %v318, %v334
        %v338 = vsub.f32 %v317, %v335
        %v339 = vsub.f32 %v316, %v336
        %vm340 = vcmp.eq.f32.partialorder %v337, 0.0
        %vm341 = vcmp.eq.f32.partialorder %v338, 0.0
        %vm342 = vcmp.eq.f32.partialorder %v339, 0.0
        %vm343 = vcmp.eq.f32.partialorder %v337, 1.0
        %vm344 = vcmp.eq.f32.partialorder %v338, 1.0
        %vm345 = vcmp.eq.f32.partialorder %v339, 1.0
        %v346 = vsel %vm343, %v265, %v274
        %v347 = vsel %vm344, %v266, %v275
        %v348 = vsel %vm345, %v267, %v276
        %v349 = vsel %vm340, %v256, %v346
        %v350 = vsel %vm341, %v257, %v347
        %v351 = vsel %vm342, %v258, %v348
        %vm352 = vcmp.eq.f32.partialorder %v331, %v235
        %vm353 = vcmp.eq.f32.partialorder %v332, %v236
        %vm354 = vcmp.eq.f32.partialorder %v333, %v237
        %v355 = vsel %vm352, %v349, 0.0
        %v356 = vsel %vm353, %v350, 0.0
        %v357 = vsel %vm354, %v351, 0.0
        %v358 = vmul.f32 %v355, %v327
        %v359 = vmul.f32 %v356, %v326
        %v360 = vmul.f32 %v357, %v325
        %v361 = vadd.f32 %v306, %v358
        %v362 = vadd.f32 %v307, %v359
        %v363 = vadd.f32 %v308, %v360
        %364 = vrot.lane.b32.xlu0 %v228, 2
        %v365 = vpop.permute.xlu0 %364
        %366 = vrot.lane.b32.xlu0 %v229, 2
        %v367 = vpop.permute.xlu0 %366
        %368 = vrot.lane.b32.xlu0 %v230, 2
        %v369 = vpop.permute.xlu0 %368
        %vm370 = vcmp.lt.s32.totalorder %v225, 2
        %v371 = vsel %vm370, %v367, %v369
        %v372 = vsel %vm370, %v365, %v367
        %v373 = vsel %vm370, %v369, %v365
        %374 = vrot.lane.b32.xlu0 %v294, 2
        %v375 = vpop.permute.xlu0 %374
        %376 = vrot.lane.b32.xlu0 %v298, 2
        %v377 = vpop.permute.xlu0 %376
        %378 = vrot.lane.b32.xlu0 %v302, 2
        %v379 = vpop.permute.xlu0 %378
        %v380 = vsel %vm370, %v377, %v379
        %v381 = vsel %vm370, %v375, %v377
        %v382 = vsel %vm370, %v379, %v375
        %v383 = vmul.f32 %v373, %v231
        %v384 = vmul.f32 %v372, %v231
        %v385 = vmul.f32 %v371, %v231
        %v386 = vfloor.f32 %v383
        %v387 = vfloor.f32 %v384
        %v388 = vfloor.f32 %v385
        %v389 = vmul.f32 %v386, 3.0
        %v390 = vmul.f32 %v387, 3.0
        %v391 = vmul.f32 %v388, 3.0
        %v392 = vsub.f32 %v373, %v389
        %v393 = vsub.f32 %v372, %v390
        %v394 = vsub.f32 %v371, %v391
        %vm395 = vcmp.eq.f32.partialorder %v392, 0.0
        %vm396 = vcmp.eq.f32.partialorder %v393, 0.0
        %vm397 = vcmp.eq.f32.partialorder %v394, 0.0
        %vm398 = vcmp.eq.f32.partialorder %v392, 1.0
        %vm399 = vcmp.eq.f32.partialorder %v393, 1.0
        %vm400 = vcmp.eq.f32.partialorder %v394, 1.0
        %v401 = vsel %vm398, %v265, %v274
        %v402 = vsel %vm399, %v266, %v275
        %v403 = vsel %vm400, %v267, %v276
        %v404 = vsel %vm395, %v256, %v401
        %v405 = vsel %vm396, %v257, %v402
        %v406 = vsel %vm397, %v258, %v403
        %vm407 = vcmp.eq.f32.partialorder %v386, %v235
        %vm408 = vcmp.eq.f32.partialorder %v387, %v236
        %vm409 = vcmp.eq.f32.partialorder %v388, %v237
        %v410 = vsel %vm407, %v404, 0.0
        %v411 = vsel %vm408, %v405, 0.0
        %v412 = vsel %vm409, %v406, 0.0
        %v413 = vmul.f32 %v410, %v382
        %v414 = vmul.f32 %v411, %v381
        %v415 = vmul.f32 %v412, %v380
        %v416 = vadd.f32 %v361, %v413
        %v417 = vadd.f32 %v362, %v414
        %v418 = vadd.f32 %v363, %v415
        %419 = vrot.lane.b32.xlu0 %v228, 127
        %v420 = vpop.permute.xlu0 %419
        %421 = vrot.lane.b32.xlu0 %v229, 127
        %v422 = vpop.permute.xlu0 %421
        %423 = vrot.lane.b32.xlu0 %v230, 127
        %v424 = vpop.permute.xlu0 %423
        %vm425 = vcmp.lt.s32.totalorder %v225, 127
        %v426 = vsel %vm425, %v422, %v424
        %v427 = vsel %vm425, %v420, %v422
        %v428 = vsel %vm425, %v424, %v420
        %429 = vrot.lane.b32.xlu0 %v294, 127
        %v430 = vpop.permute.xlu0 %429
        %431 = vrot.lane.b32.xlu0 %v298, 127
        %v432 = vpop.permute.xlu0 %431
        %433 = vrot.lane.b32.xlu0 %v302, 127
        %v434 = vpop.permute.xlu0 %433
        %v435 = vsel %vm425, %v432, %v434
        %v436 = vsel %vm425, %v430, %v432
        %v437 = vsel %vm425, %v434, %v430
        %v438 = vmul.f32 %v427, %v231
        %v439 = vmul.f32 %v426, %v231
        %v440 = vmul.f32 %v428, %v231
        %v441 = vfloor.f32 %v438
        %v442 = vfloor.f32 %v439
        %v443 = vfloor.f32 %v440
        %v444 = vmul.f32 %v441, 3.0
        %v445 = vmul.f32 %v442, 3.0
        %v446 = vmul.f32 %v443, 3.0
        %v447 = vsub.f32 %v427, %v444
        %v448 = vsub.f32 %v426, %v445
        %v449 = vsub.f32 %v428, %v446
        %vm450 = vcmp.eq.f32.partialorder %v447, 0.0
        %vm451 = vcmp.eq.f32.partialorder %v448, 0.0
        %vm452 = vcmp.eq.f32.partialorder %v449, 0.0
        %vm453 = vcmp.eq.f32.partialorder %v447, 1.0
        %vm454 = vcmp.eq.f32.partialorder %v448, 1.0
        %vm455 = vcmp.eq.f32.partialorder %v449, 1.0
        %v456 = vsel %vm453, %v265, %v274
        %v457 = vsel %vm454, %v266, %v275
        %v458 = vsel %vm455, %v267, %v276
        %v459 = vsel %vm450, %v256, %v456
        %v460 = vsel %vm451, %v257, %v457
        %v461 = vsel %vm452, %v258, %v458
        %vm462 = vcmp.eq.f32.partialorder %v441, %v235
        %vm463 = vcmp.eq.f32.partialorder %v442, %v236
        %vm464 = vcmp.eq.f32.partialorder %v443, %v237
        %v465 = vsel %vm462, %v459, 0.0
        %v466 = vsel %vm463, %v460, 0.0
        %v467 = vsel %vm464, %v461, 0.0
        %v468 = vmul.f32 %v465, %v436
        %v469 = vmul.f32 %v466, %v435
        %v470 = vmul.f32 %v467, %v437
        %v471 = vadd.f32 %v416, %v468
        %v472 = vadd.f32 %v417, %v469
        %v473 = vadd.f32 %v418, %v470
        %474 = vrot.lane.b32.xlu0 %v228, 126
        %v475 = vpop.permute.xlu0 %474
        %476 = vrot.lane.b32.xlu0 %v229, 126
        %v477 = vpop.permute.xlu0 %476
        %478 = vrot.lane.b32.xlu0 %v230, 126
        %v479 = vpop.permute.xlu0 %478
        %vm480 = vcmp.lt.s32.totalorder %v225, 126
        %v481 = vsel %vm480, %v477, %v479
        %v482 = vsel %vm480, %v475, %v477
        %v483 = vsel %vm480, %v479, %v475
        %484 = vrot.lane.b32.xlu0 %v294, 126
        %v485 = vpop.permute.xlu0 %484
        %486 = vrot.lane.b32.xlu0 %v298, 126
        %v487 = vpop.permute.xlu0 %486
        %488 = vrot.lane.b32.xlu0 %v302, 126
        %v489 = vpop.permute.xlu0 %488
        %v490 = vsel %vm480, %v487, %v489
        %v491 = vsel %vm480, %v485, %v487
        %v492 = vsel %vm480, %v489, %v485
        %v493 = vmul.f32 %v482, %v231
        %v494 = vmul.f32 %v481, %v231
        %v495 = vmul.f32 %v483, %v231
        %v496 = vfloor.f32 %v493
        %v497 = vfloor.f32 %v494
        %v498 = vfloor.f32 %v495
        %v499 = vmul.f32 %v496, 3.0
        %v500 = vmul.f32 %v497, 3.0
        %v501 = vmul.f32 %v498, 3.0
        %v502 = vsub.f32 %v482, %v499
        %v503 = vsub.f32 %v481, %v500
        %v504 = vsub.f32 %v483, %v501
        %vm505 = vcmp.eq.f32.partialorder %v502, 0.0
        %vm506 = vcmp.eq.f32.partialorder %v503, 0.0
        %vm507 = vcmp.eq.f32.partialorder %v504, 0.0
        %vm508 = vcmp.eq.f32.partialorder %v502, 1.0
        %vm509 = vcmp.eq.f32.partialorder %v503, 1.0
        %vm510 = vcmp.eq.f32.partialorder %v504, 1.0
        %v511 = vsel %vm508, %v265, %v274
        %v512 = vsel %vm509, %v266, %v275
        %v513 = vsel %vm510, %v267, %v276
        %v514 = vsel %vm505, %v256, %v511
        %v515 = vsel %vm506, %v257, %v512
        %v516 = vsel %vm507, %v258, %v513
        %vm517 = vcmp.eq.f32.partialorder %v496, %v235
        %vm518 = vcmp.eq.f32.partialorder %v497, %v236
        %vm519 = vcmp.eq.f32.partialorder %v498, %v237
        %v520 = vsel %vm517, %v514, 0.0
        %v521 = vsel %vm518, %v515, 0.0
        %v522 = vsel %vm519, %v516, 0.0
        %v523 = vmul.f32 %v520, %v491
        %v524 = vmul.f32 %v521, %v490
        %v525 = vmul.f32 %v522, %v492
        %v526 = vadd.f32 %v471, %v523
        %v527 = vadd.f32 %v472, %v524
        %v528 = vadd.f32 %v473, %v525
        %v532 = vcombine.low %v526, %v527
        %v534 = vunpack.c.l.s4 1966171168
        %v535 = vunpack.c.0.s8 %v534
        %v536 = vlaneseq
        %v537 = vshrl.u32 %v536, 7
        %v538 = vsub.s32 %v535, %v537
        %v539 = vrot.slane %v532, %v538
        %v541 = vunpack.c.l.s4 1966171168
        %v542 = vunpack.c.0.s8 %v541
        %v543 = vlaneseq
        %v544 = vshrl.u32 %v543, 7
        %v545 = vsub.s32 %v542, %v544
        %v546 = vrot.slane %v528, %v545
        %v547 = vcombine.low %v539, %v546
        %v549 = vunpack.c.l.s4 1966171168
        %v550 = vunpack.c.0.s8 %v549
        %v551 = vlaneseq
        %v552 = vshrl.u32 %v551, 7
        %v553 = vsub.s32 %v550, %v552
        %v554 = vrot.slane %v547, %v553
        %v556 = vlaneseq
        %vm557 = vcmp.ge.s32.totalorder %v556, 0
        %vm558 = vcmp.lt.s32.totalorder %v556, 384
        %vm559 = vmand %vm557, %vm558
        %560 = vst.msk [vmem:[%s188] sm:$0x7] %vm559, %v554
        %p561 = scmp.lt.s32.totalorder %s18, 1
        %s562 = scalar_select %p561, %s18, 1
        %p563 = scmp.lt.s32.totalorder %s19, 0
        %s564 = scalar_select %p563, %s19, 0
        %s565 = smul.addr %s564, 3
        %s566 = smul.addr %s562, 3
        %s567 = sadd.s32 %s565, %s566
        %s568 = scalar_lea.vmem %s2, %s567
        // Predicated region
        $region33: #{rt_generator_forward.3} parent=27 // pred_check
          %p569 = pneg %p95
        $region34: #{rt_generator_forward.3} parent=27 // pred_check_branch
          %571 = sbr.rel (%p569) target = $region36
        $region35: #{rt_generator_forward.3} parent=27 // pred_region
          _
        $region36: #{rt_generator_forward.3} parent=27 // pred_fallthru
          _
      $region28: #{rt_generator_forward.3} parent=5 // pred_fallthru
        _
      %p572 = scmp.le.s32.totalorder 2, %s9
      // Predicated region
      $region37: #{rt_generator_forward.3} parent=5 // pred_check
        %p573 = pneg %p572
      $region38: #{rt_generator_forward.3} parent=5 // pred_check_branch
        %575 = sbr.rel (%p573) target = $region40
      $region39: #{rt_generator_forward.3} parent=5 // pred_region
        %s576 = ssub.s32 %s9, 2
        // Predicated region
        $region41: #{rt_generator_forward.3} parent=39 // pred_check
          %p577 = pneg %p101
        $region42: #{rt_generator_forward.3} parent=39 // pred_check_branch
          %579 = sbr.rel (%p577) target = $region44
        $region43: #{rt_generator_forward.3} parent=39 // pred_region
          %p580 = scmp.lt.s32.totalorder %s20, 1
          %s581 = scalar_select %p580, %s20, 1
          %p582 = scmp.lt.s32.totalorder %s21, 0
          %s583 = scalar_select %p582, %s21, 0
          %s584 = smul.addr %s583, 3
          %s585 = smul.addr %s581, 3
          %s586 = sadd.s32 %s584, %s585
          %s587 = scalar_lea.vmem %s2, %s586
        $region44: #{rt_generator_forward.3} parent=39 // pred_fallthru
          _
      $region40: #{rt_generator_forward.3} parent=5 // pred_fallthru
        _
    $region6: #{rt_generator_forward.3} parent=1 // loop_footer
      %s13 = sadd.s32 1, %s9
    $region7: #{rt_generator_forward.3} parent=1 // loop_footer_branch
      %8 = sbr.rel target = $region3
    $region8: #{rt_generator_forward.3} parent=1 // loop_exit
      _
    %588 = vsyncpa [#allocation3], 1
    %s589 = scalar_lea.sflag [#allocation3], 1
    %590 = vsyncpa %s589, 1

// kernel: rt_generator_forward.2
$region0: #{rt_generator_forward.2}
  #allocation0 [shape = 'u32[]', space=smem, size = 0x4, offset = 0x4, fixed_abs, tag = 'smem constant byte address 0x4 - core index']
  #allocation1 [shape = 'u32[144,128]{1,0:T(1,128)}', space=vmem, size = 0x12000, scoped, tag = 'internal scratch']
  %s0 = inlined_call_operand.vmem [shape: f32[2,128], index: 0, kind: input, shape index: {}]
  %s1 = inlined_call_operand.vmem [shape: f32[2,3], index: 1, kind: input, shape index: {}]
  %s2 = inlined_call_operand.vmem [shape: bf16[128,256], index: 2, kind: input, shape index: {}]
  %s3 = inlined_call_operand.vmem [shape: f32[1,256], index: 3, kind: input, shape index: {}]
  %s4 = inlined_call_operand.vmem [shape: f32[1,256], index: 4, kind: input, shape index: {}]
  %s5 = inlined_call_operand.hbm [shape: bf16[4,256,256], index: 5, kind: input, shape index: {}]
  %s6 = inlined_call_operand.vmem [shape: f32[4,1,256], index: 6, kind: input, shape index: {}]
  %s7 = inlined_call_operand.vmem [shape: f32[4,1,256], index: 7, kind: input, shape index: {}]
  %s8 = inlined_call_operand.hbm [shape: f32[2,256], index: 8, kind: output, shape index: {0}]
  %s9 = inlined_call_operand.vmem [shape: f32[2,4], index: 9, kind: output, shape index: {1}]
  %10 = xla_tuple %s8, %s9
  %s11 = sld [smem:[#allocation0]]
  $region54: #{rt_generator_forward.2} parent=0
    _
  %s13 = ssub.s32 1, %s11
  %s14 = scalar_select 0, %s13, %s11
  $region1: #{rt_generator_forward.2} parent=0
    #allocation2 [shape = 'u8[524288]{0}', space=vmem, size = 0x80000, scoped, tag = 'input window, operand 5, single buffered']
    #allocation3 [shape = 's32[1]{0}', space=sflag, size = 0x4, scoped, tag = 'scoped memory for rt_generator_forward.2']
    #allocation4 [shape = 's32[1]{0}', space=sflag, size = 0x4, scoped, tag = 'scoped memory for rt_generator_forward.2']
    #allocation5 [shape = 'u8[2048]{0}', space=vmem, size = 0x800, scoped, tag = 'output window, operand 0, single buffered']
    %15 = vsyncpa [#allocation3], 0
    %16 = vsyncpa [#allocation4], 0
    // Predicated region
    $region2: #{rt_generator_forward.2} parent=1 // pred_check
      _
    $region3: #{rt_generator_forward.2} parent=1 // pred_check_branch
      %18 = sbr.rel (0) target = $region5
    $region4: #{rt_generator_forward.2} parent=1 // pred_region
      _
    $region5: #{rt_generator_forward.2} parent=1 // pred_fallthru
      _
    // Predicated region
    $region6: #{rt_generator_forward.2} parent=1 // pred_check
      _
    $region7: #{rt_generator_forward.2} parent=1 // pred_check_branch
      %20 = sbr.rel (0) target = $region9
    $region8: #{rt_generator_forward.2} parent=1 // pred_region
      _
    $region9: #{rt_generator_forward.2} parent=1 // pred_fallthru
      _
    // Predicated region
    $region10: #{rt_generator_forward.2} parent=1 // pred_check
      _
    $region11: #{rt_generator_forward.2} parent=1 // pred_check_branch
      %22 = sbr.rel (0) target = $region13
    $region12: #{rt_generator_forward.2} parent=1 // pred_region
      _
    $region13: #{rt_generator_forward.2} parent=1 // pred_fallthru
      _
    // Predicated region
    $region14: #{rt_generator_forward.2} parent=1 // pred_check
      _
    $region15: #{rt_generator_forward.2} parent=1 // pred_check_branch
      %24 = sbr.rel (0) target = $region17
    $region16: #{rt_generator_forward.2} parent=1 // pred_region
      _
    $region17: #{rt_generator_forward.2} parent=1 // pred_fallthru
      _
    // Predicated region
    $region18: #{rt_generator_forward.2} parent=1 // pred_check
      _
    $region19: #{rt_generator_forward.2} parent=1 // pred_check_branch
      %26 = sbr.rel (0) target = $region21
    $region20: #{rt_generator_forward.2} parent=1 // pred_region
      _
    $region21: #{rt_generator_forward.2} parent=1 // pred_fallthru
      _
    // Predicated region
    $region22: #{rt_generator_forward.2} parent=1 // pred_check
      _
    $region23: #{rt_generator_forward.2} parent=1 // pred_check_branch
      %28 = sbr.rel (0) target = $region25
    $region24: #{rt_generator_forward.2} parent=1 // pred_region
      %s30 = ssub.s32 16384, 16384
      %31 = vsyncadd [#allocation3], %s30
      %s32 = sshll.u32 [#allocation2], 4
      %s33 = int_to_ptr.vmem [resolvable:$true] %s32
      %38 = dma.hbm_to_vmem [thread:$0]  %s5, 16384, %s33, [#allocation3], 128, 128, 8
    $region25: #{rt_generator_forward.2} parent=1 // pred_fallthru
      _
    // Predicated region
    $region26: #{rt_generator_forward.2} parent=1 // pred_check
      _
    $region27: #{rt_generator_forward.2} parent=1 // pred_check_branch
      %40 = sbr.rel (0) target = $region29
    $region28: #{rt_generator_forward.2} parent=1 // pred_region
      _
    $region29: #{rt_generator_forward.2} parent=1 // pred_fallthru
      _
    // Predicated region
    $region30: #{rt_generator_forward.2} parent=1 // pred_check
      _
    $region31: #{rt_generator_forward.2} parent=1 // pred_check_branch
      %42 = sbr.rel (0) target = $region33
    $region32: #{rt_generator_forward.2} parent=1 // pred_region
      _
    $region33: #{rt_generator_forward.2} parent=1 // pred_fallthru
      _
    // Predicated region
    $region34: #{rt_generator_forward.2} parent=1 // pred_check
      _
    $region35: #{rt_generator_forward.2} parent=1 // pred_check_branch
      %44 = sbr.rel (0) target = $region37
    $region36: #{rt_generator_forward.2} parent=1 // pred_region
      %45 = dma.done [#allocation3], 16384
    $region37: #{rt_generator_forward.2} parent=1 // pred_fallthru
      _
    %v47 = vld [vmem:[%s0] sm:$0x3]
    %v48 = vpack.c.bf16 %v47, %v47
    %v49 = vld [vmem:[%s2] sm:$0xff]
    %v50 = vld [vmem:[%s2 + $0x8] sm:$0xff]
    %v51 = vld [vmem:[%s2 + $0x10] sm:$0xff]
    %v52 = vld [vmem:[%s2 + $0x18] sm:$0xff]
    %v53 = vld [vmem:[%s2 + $0x20] sm:$0xff]
    %v54 = vld [vmem:[%s2 + $0x28] sm:$0xff]
    %v55 = vld [vmem:[%s2 + $0x30] sm:$0xff]
    %v56 = vld [vmem:[%s2 + $0x38] sm:$0xff]
    %v57 = vld [vmem:[%s2 + $0x40] sm:$0xff]
    %v58 = vld [vmem:[%s2 + $0x48] sm:$0xff]
    %v59 = vld [vmem:[%s2 + $0x50] sm:$0xff]
    %v60 = vld [vmem:[%s2 + $0x58] sm:$0xff]
    %v61 = vld [vmem:[%s2 + $0x60] sm:$0xff]
    %v62 = vld [vmem:[%s2 + $0x68] sm:$0xff]
    %v63 = vld [vmem:[%s2 + $0x70] sm:$0xff]
    %v64 = vld [vmem:[%s2 + $0x78] sm:$0xff]
    %v81 = vunpack.c.l.b16 %v49
    %v82 = vunpack.c.h.b16 %v49
    %v83 = vunpack.c.l.b16 %v50
    %v84 = vunpack.c.h.b16 %v50
    %v85 = vunpack.c.l.b16 %v51
    %v86 = vunpack.c.h.b16 %v51
    %v87 = vunpack.c.l.b16 %v52
    %v88 = vunpack.c.h.b16 %v52
    %v89 = vunpack.c.l.b16 %v53
    %v90 = vunpack.c.h.b16 %v53
    %v91 = vunpack.c.l.b16 %v54
    %v92 = vunpack.c.h.b16 %v54
    %v93 = vunpack.c.l.b16 %v55
    %v94 = vunpack.c.h.b16 %v55
    %v95 = vunpack.c.l.b16 %v56
    %v96 = vunpack.c.h.b16 %v56
    %v97 = vunpack.c.l.b16 %v57
    %v98 = vunpack.c.h.b16 %v57
    %v99 = vunpack.c.l.b16 %v58
    %v100 = vunpack.c.h.b16 %v58
    %v101 = vunpack.c.l.b16 %v59
    %v102 = vunpack.c.h.b16 %v59
    %v103 = vunpack.c.l.b16 %v60
    %v104 = vunpack.c.h.b16 %v60
    %v105 = vunpack.c.l.b16 %v61
    %v106 = vunpack.c.h.b16 %v61
    %v107 = vunpack.c.l.b16 %v62
    %v108 = vunpack.c.h.b16 %v62
    %v109 = vunpack.c.l.b16 %v63
    %v110 = vunpack.c.h.b16 %v63
    %v111 = vunpack.c.l.b16 %v64
    %v112 = vunpack.c.h.b16 %v64
    %v113 = vpack.c.b16 %v83, %v81
    %v114 = vpack.c.b16 %v84, %v82
    %v115 = vpack.c.b16 %v87, %v85
    %v116 = vpack.c.b16 %v88, %v86
    %v117 = vpack.c.b16 %v91, %v89
    %v118 = vpack.c.b16 %v92, %v90
    %v119 = vpack.c.b16 %v95, %v93
    %v120 = vpack.c.b16 %v96, %v94
    %v121 = vpack.c.b16 %v99, %v97
    %v122 = vpack.c.b16 %v100, %v98
    %v123 = vpack.c.b16 %v103, %v101
    %v124 = vpack.c.b16 %v104, %v102
    %v125 = vpack.c.b16 %v107, %v105
    %v126 = vpack.c.b16 %v108, %v106
    %v127 = vpack.c.b16 %v111, %v109
    %v128 = vpack.c.b16 %v112, %v110
    %145 = vmatprep.subr.bf16.mxu0 %v128
    %146 = vmatpush1.bf16.msra.mxu0 %v127
    %147 = vmatprep.subr.bf16.mxu0 %v126
    %148 = vmatpush1.bf16.msra.mxu0 %v125
    %149 = vmatprep.subr.bf16.mxu0 %v124
    %150 = vmatpush1.bf16.msra.mxu0 %v123
    %151 = vmatprep.subr.bf16.mxu0 %v122
    %152 = vmatpush1.bf16.msra.mxu0 %v121
    %153 = vmatprep.subr.bf16.mxu0 %v120
    %154 = vmatpush1.bf16.msra.mxu0 %v119
    %155 = vmatprep.subr.bf16.mxu0 %v118
    %156 = vmatpush1.bf16.msra.mxu0 %v117
    %157 = vmatprep.subr.bf16.mxu0 %v116
    %158 = vmatpush1.bf16.msra.mxu0 %v115
    %159 = vmatprep.subr.bf16.mxu0 %v114
    %160 = vmatpush1.bf16.msra.mxu0 %v113
    %161 = vmatprep.subr.bf16.mxu0 0
    %162 = vmatpush2.bf16.msra.mxu0 0
    %163 = vmatprep.subr.bf16.mxu0 0
    %164 = vmatpush2.bf16.msra.mxu0 0
    %165 = vmatprep.subr.bf16.mxu0 0
    %166 = vmatpush2.bf16.msra.mxu0 0
    %167 = vmatprep.subr.bf16.mxu0 0
    %168 = vmatpush2.bf16.msra.mxu0 0
    %169 = vmatprep.subr.bf16.mxu0 0
    %170 = vmatpush2.bf16.msra.mxu0 0
    %171 = vmatprep.subr.bf16.mxu0 0
    %172 = vmatpush2.bf16.msra.mxu0 0
    %173 = vmatprep.subr.bf16.mxu0 0
    %174 = vmatpush2.bf16.msra.mxu0 0
    %175 = vmatprep.subr.bf16.mxu0 0
    %176 = vmatpush2.bf16.msra.mxu0 0
    %177 = vmatprep.mubr.bf16.mxu0 0
    %178 = vmatmul.mubr.bf16.gmra.mxu0 %v48
    %v179 = vpop.f32.mrf.mxu0
    %v180 = vadd.f32 0.0, %v179
    %v181 = vpop.f32.mrf.mxu0
    %v182 = vadd.f32 0.0, %v181
    %v183 = vpop.f32.mrf.mxu0
    %v184 = vpop.f32.mrf.mxu0
    %185 = vdwg.mxu0
    %v186 = vld [vmem:[%s3] sm:$0x3]
    %v187 = vld [vmem:[%s4] sm:$0x3]
    %vm188 = vcmask 1041408
    %v189 = vsel %vm188, %v180, 0.0
    %v190 = vrot.slane %v189, 4
    %v191 = vadd.f32 %v189, %v190
    %v192 = vrot.slane %v191, 2
    %v193 = vadd.f32 %v191, %v192
    %v194 = vrot.slane %v193, 1
    %v195 = vadd.f32 %v193, %v194
    %v196 = vsel %vm188, %v182, 0.0
    %v197 = vrot.slane %v196, 4
    %v198 = vadd.f32 %v196, %v197
    %v199 = vrot.slane %v198, 2
    %v200 = vadd.f32 %v198, %v199
    %v201 = vrot.slane %v200, 1
    %v202 = vadd.f32 %v200, %v201
    %v203 = vrcp.pop 2.0
    %v204 = vmul.f32 %v195, %v203
    %v205 = vmul.f32 %v202, %v203
    %v206 = vsub.f32 %v180, %v204
    %v207 = vsub.f32 %v182, %v205
    %v208 = vmul.f32 %v206, %v206
    %v209 = vmul.f32 %v207, %v207
    %v210 = vsel %vm188, %v208, 0.0
    %v211 = vrot.slane %v210, 4
    %v212 = vadd.f32 %v210, %v211
    %v213 = vrot.slane %v212, 2
    %v214 = vadd.f32 %v212, %v213
    %v215 = vrot.slane %v214, 1
    %v216 = vadd.f32 %v214, %v215
    %v217 = vsel %vm188, %v209, 0.0
    %v218 = vrot.slane %v217, 4
    %v219 = vadd.f32 %v217, %v218
    %v220 = vrot.slane %v219, 2
    %v221 = vadd.f32 %v219, %v220
    %v222 = vrot.slane %v221, 1
    %v223 = vadd.f32 %v221, %v222
    %v224 = vmul.f32 %v216, %v203
    %v225 = vmul.f32 %v223, %v203
    %v226 = vadd.f32 %v224, 1e-05
    %v227 = vadd.f32 %v225, 1e-05
    %v228 = vrsqrt.pop %v226
    %v229 = vrsqrt.pop %v227
    %v230 = vmul.f32 %v206, %v228
    %v231 = vmul.f32 %v207, %v229
    %v233 = vlaneseq
    %v234 = vshrl.u32 %v233, 7
    %v235 = vsub.s32 0, %v234
    %v236 = vrot.slane %v186, %v235
    %v237 = vlaneseq
    %v238 = vshrl.u32 %v237, 7
    %v239 = vsub.s32 1, %v238
    %v240 = vrot.slane %v186, %v239
    %v243 = vmul.f32 %v230, %v236
    %v244 = vmul.f32 %v231, %v240
    %v246 = vlaneseq
    %v247 = vshrl.u32 %v246, 7
    %v248 = vsub.s32 0, %v247
    %v249 = vrot.slane %v187, %v248
    %v250 = vlaneseq
    %v251 = vshrl.u32 %v250, 7
    %v252 = vsub.s32 1, %v251
    %v253 = vrot.slane %v187, %v252
    %v256 = vadd.f32 %v243, %v249
    %v257 = vadd.f32 %v244, %v253
    %vm258 = vcmp.ge.f32.partialorder %v256, 0.0
    %vm259 = vcmp.ge.f32.partialorder %v257, 0.0
    %v260 = vmul.f32 %v256, 0.01
    %v261 = vmul.f32 %v257, 0.01
    %v262 = vsel %vm258, %v256, %v260
    %v263 = vsel %vm259, %v257, %v261
    %v264 = vpack.c.bf16 %v262, %v262
    %v265 = vpack.c.bf16 %v263, %v263
    %v266 = vld [vmem:[#allocation2] sm:$0xff]
    %v267 = vld [vmem:[#allocation2 + $0x8] sm:$0xff]
    %v268 = vld [vmem:[#allocation2 + $0x10] sm:$0xff]
    %v269 = vld [vmem:[#allocation2 + $0x18] sm:$0xff]
    %v270 = vld [vmem:[#allocation2 + $0x20] sm:$0xff]
    %v271 = vld [vmem:[#allocation2 + $0x28] sm:$0xff]
    %v272 = vld [vmem:[#allocation2 + $0x30] sm:$0xff]
    %v273 = vld [vmem:[#allocation2 + $0x38] sm:$0xff]
    %v274 = vld [vmem:[#allocation2 + $0x40] sm:$0xff]
    %v275 = vld [vmem:[#allocation2 + $0x48] sm:$0xff]
    %v276 = vld [vmem:[#allocation2 + $0x50] sm:$0xff]
    %v277 = vld [vmem:[#allocation2 + $0x58] sm:$0xff]
    %v278 = vld [vmem:[#allocation2 + $0x60] sm:$0xff]
    %v279 = vld [vmem:[#allocation2 + $0x68] sm:$0xff]
    %v280 = vld [vmem:[#allocation2 + $0x70] sm:$0xff]
    %v281 = vld [vmem:[#allocation2 + $0x78] sm:$0xff]
    %v282 = vld [vmem:[#allocation2 + $0x80] sm:$0xff]
    %v283 = vld [vmem:[#allocation2 + $0x88] sm:$0xff]
    %v284 = vld [vmem:[#allocation2 + $0x90] sm:$0xff]
    %v285 = vld [vmem:[#allocation2 + $0x98] sm:$0xff]
    %v286 = vld [vmem:[#allocation2 + $0xa0] sm:$0xff]
    %v287 = vld [vmem:[#allocation2 + $0xa8] sm:$0xff]
    %v288 = vld [vmem:[#allocation2 + $0xb0] sm:$0xff]
    %v289 = vld [vmem:[#allocation2 + $0xb8] sm:$0xff]
    %v290 = vld [vmem:[#allocation2 + $0xc0] sm:$0xff]
    %v291 = vld [vmem:[#allocation2 + $0xc8] sm:$0xff]
    %v292 = vld [vmem:[#allocation2 + $0xd0] sm:$0xff]
    %v293 = vld [vmem:[#allocation2 + $0xd8] sm:$0xff]
    %v294 = vld [vmem:[#allocation2 + $0xe0] sm:$0xff]
    %v295 = vld [vmem:[#allocation2 + $0xe8] sm:$0xff]
    %v296 = vld [vmem:[#allocation2 + $0xf0] sm:$0xff]
    %v297 = vld [vmem:[#allocation2 + $0xf8] sm:$0xff]
    %v330 = vunpack.c.l.b16 %v266
    %v331 = vunpack.c.h.b16 %v266
    %v332 = vunpack.c.l.b16 %v267
    %v333 = vunpack.c.h.b16 %v267
    %v334 = vunpack.c.l.b16 %v268
    %v335 = vunpack.c.h.b16 %v268
    %v336 = vunpack.c.l.b16 %v269
    %v337 = vunpack.c.h.b16 %v269
    %v338 = vunpack.c.l.b16 %v270
    %v339 = vunpack.c.h.b16 %v270
    %v340 = vunpack.c.l.b16 %v271
    %v341 = vunpack.c.h.b16 %v271
    %v342 = vunpack.c.l.b16 %v272
    %v343 = vunpack.c.h.b16 %v272
    %v344 = vunpack.c.l.b16 %v273
    %v345 = vunpack.c.h.b16 %v273
    %v346 = vunpack.c.l.b16 %v274
    %v347 = vunpack.c.h.b16 %v274
    %v348 = vunpack.c.l.b16 %v275
    %v349 = vunpack.c.h.b16 %v275
    %v350 = vunpack.c.l.b16 %v276
    %v351 = vunpack.c.h.b16 %v276
    %v352 = vunpack.c.l.b16 %v277
    %v353 = vunpack.c.h.b16 %v277
    %v354 = vunpack.c.l.b16 %v278
    %v355 = vunpack.c.h.b16 %v278
    %v356 = vunpack.c.l.b16 %v279
    %v357 = vunpack.c.h.b16 %v279
    %v358 = vunpack.c.l.b16 %v280
    %v359 = vunpack.c.h.b16 %v280
    %v360 = vunpack.c.l.b16 %v281
    %v361 = vunpack.c.h.b16 %v281
    %v362 = vunpack.c.l.b16 %v282
    %v363 = vunpack.c.h.b16 %v282
    %v364 = vunpack.c.l.b16 %v283
    %v365 = vunpack.c.h.b16 %v283
    %v366 = vunpack.c.l.b16 %v284
    %v367 = vunpack.c.h.b16 %v284
    %v368 = vunpack.c.l.b16 %v285
    %v369 = vunpack.c.h.b16 %v285
    %v370 = vunpack.c.l.b16 %v286
    %v371 = vunpack.c.h.b16 %v286
    %v372 = vunpack.c.l.b16 %v287
    %v373 = vunpack.c.h.b16 %v287
    %v374 = vunpack.c.l.b16 %v288
    %v375 = vunpack.c.h.b16 %v288
    %v376 = vunpack.c.l.b16 %v289
    %v377 = vunpack.c.h.b16 %v289
    %v378 = vunpack.c.l.b16 %v290
    %v379 = vunpack.c.h.b16 %v290
    %v380 = vunpack.c.l.b16 %v291
    %v381 = vunpack.c.h.b16 %v291
    %v382 = vunpack.c.l.b16 %v292
    %v383 = vunpack.c.h.b16 %v292
    %v384 = vunpack.c.l.b16 %v293
    %v385 = vunpack.c.h.b16 %v293
    %v386 = vunpack.c.l.b16 %v294
    %v387 = vunpack.c.h.b16 %v294
    %v388 = vunpack.c.l.b16 %v295
    %v389 = vunpack.c.h.b16 %v295
    %v390 = vunpack.c.l.b16 %v296
    %v391 = vunpack.c.h.b16 %v296
    %v392 = vunpack.c.l.b16 %v297
    %v393 = vunpack.c.h.b16 %v297
    %v394 = vpack.c.b16 %v332, %v330
    %v395 = vpack.c.b16 %v333, %v331
    %v396 = vpack.c.b16 %v336, %v334
    %v397 = vpack.c.b16 %v337, %v335
    %v398 = vpack.c.b16 %v340, %v338
    %v399 = vpack.c.b16 %v341, %v339
    %v400 = vpack.c.b16 %v344, %v342
    %v401 = vpack.c.b16 %v345, %v343
    %v402 = vpack.c.b16 %v348, %v346
    %v403 = vpack.c.b16 %v349, %v347
    %v404 = vpack.c.b16 %v352, %v350
    %v405 = vpack.c.b16 %v353, %v351
    %v406 = vpack.c.b16 %v356, %v354
    %v407 = vpack.c.b16 %v357, %v355
    %v408 = vpack.c.b16 %v360, %v358
    %v409 = vpack.c.b16 %v361, %v359
    %v410 = vpack.c.b16 %v364, %v362
    %v411 = vpack.c.b16 %v365, %v363
    %v412 = vpack.c.b16 %v368, %v366
    %v413 = vpack.c.b16 %v369, %v367
    %v414 = vpack.c.b16 %v372, %v370
    %v415 = vpack.c.b16 %v373, %v371
    %v416 = vpack.c.b16 %v376, %v374
    %v417 = vpack.c.b16 %v377, %v375
    %v418 = vpack.c.b16 %v380, %v378
    %v419 = vpack.c.b16 %v381, %v379
    %v420 = vpack.c.b16 %v384, %v382
    %v421 = vpack.c.b16 %v385, %v383
    %v422 = vpack.c.b16 %v388, %v386
    %v423 = vpack.c.b16 %v389, %v387
    %v424 = vpack.c.b16 %v392, %v390
    %v425 = vpack.c.b16 %v393, %v391
    %458 = vmatprep.subr.bf16.mxu0 %v409
    %459 = vmatpush1.bf16.msra.mxu0 %v408
    %460 = vmatprep.subr.bf16.mxu0 %v407
    %461 = vmatpush1.bf16.msra.mxu0 %v406
    %462 = vmatprep.subr.bf16.mxu0 %v405
    %463 = vmatpush1.bf16.msra.mxu0 %v404
    %464 = vmatprep.subr.bf16.mxu0 %v403
    %465 = vmatpush1.bf16.msra.mxu0 %v402
    %466 = vmatprep.subr.bf16.mxu0 %v401
    %467 = vmatpush1.bf16.msra.mxu0 %v400
    %468 = vmatprep.subr.bf16.mxu0 %v399
    %469 = vmatpush1.bf16.msra.mxu0 %v398
    %470 = vmatprep.subr.bf16.mxu0 %v397
    %471 = vmatpush1.bf16.msra.mxu0 %v396
    %472 = vmatprep.subr.bf16.mxu0 %v395
    %473 = vmatpush1.bf16.msra.mxu0 %v394
    %474 = vmatprep.subr.bf16.mxu0 %v425
    %475 = vmatpush2.bf16.msra.mxu0 %v424
    %476 = vmatprep.subr.bf16.mxu0 %v423
    %477 = vmatpush2.bf16.msra.mxu0 %v422
    %478 = vmatprep.subr.bf16.mxu0 %v421
    %479 = vmatpush2.bf16.msra.mxu0 %v420
    %480 = vmatprep.subr.bf16.mxu0 %v419
    %481 = vmatpush2.bf16.msra.mxu0 %v418
    %482 = vmatprep.subr.bf16.mxu0 %v417
    %483 = vmatpush2.bf16.msra.mxu0 %v416
    %484 = vmatprep.subr.bf16.mxu0 %v415
    %485 = vmatpush2.bf16.msra.mxu0 %v414
    %486 = vmatprep.subr.bf16.mxu0 %v413
    %487 = vmatpush2.bf16.msra.mxu0 %v412
    %488 = vmatprep.subr.bf16.mxu0 %v411
    %489 = vmatpush2.bf16.msra.mxu0 %v410
    %490 = vmatprep.mubr.bf16.mxu0 %v265
    %491 = vmatmul.mubr.bf16.gmra.mxu0 %v264
    %v492 = vpop.f32.mrf.mxu0
    %v493 = vadd.f32 0.0, %v492
    %v494 = vpop.f32.mrf.mxu0
    %v495 = vadd.f32 0.0, %v494
    %v496 = vpop.f32.mrf.mxu0
    %v497 = vpop.f32.mrf.mxu0
    %498 = vdwg.mxu0
    %v499 = vld [vmem:[%s6] sm:$0x3]
    %v500 = vld [vmem:[%s7] sm:$0x3]
    %v501 = vsel %vm188, %v493, 0.0
    %v502 = vrot.slane %v501, 4
    %v503 = vadd.f32 %v501, %v502
    %v504 = vrot.slane %v503, 2
    %v505 = vadd.f32 %v503, %v504
    %v506 = vrot.slane %v505, 1
    %v507 = vadd.f32 %v505, %v506
    %v508 = vsel %vm188, %v495, 0.0
    %v509 = vrot.slane %v508, 4
    %v510 = vadd.f32 %v508, %v509
    %v511 = vrot.slane %v510, 2
    %v512 = vadd.f32 %v510, %v511
    %v513 = vrot.slane %v512, 1
    %v514 = vadd.f32 %v512, %v513
    %v515 = vmul.f32 %v507, %v203
    %v516 = vmul.f32 %v514, %v203
    %v517 = vsub.f32 %v493, %v515
    %v518 = vsub.f32 %v495, %v516
    %v519 = vmul.f32 %v517, %v517
    %v520 = vmul.f32 %v518, %v518
    %v521 = vsel %vm188, %v519, 0.0
    %v522 = vrot.slane %v521, 4
    %v523 = vadd.f32 %v521, %v522
    %v524 = vrot.slane %v523, 2
    %v525 = vadd.f32 %v523, %v524
    %v526 = vrot.slane %v525, 1
    %v527 = vadd.f32 %v525, %v526
    %v528 = vsel %vm188, %v520, 0.0
    %v529 = vrot.slane %v528, 4
    %v530 = vadd.f32 %v528, %v529
    %v531 = vrot.slane %v530, 2
    %v532 = vadd.f32 %v530, %v531
    %v533 = vrot.slane %v532, 1
    %v534 = vadd.f32 %v532, %v533
    %v535 = vmul.f32 %v527, %v203
    %v536 = vmul.f32 %v534, %v203
    %v537 = vadd.f32 %v535, 1e-05
    %v538 = vadd.f32 %v536, 1e-05
    %v539 = vrsqrt.pop %v537
    %v540 = vrsqrt.pop %v538
    %v541 = vmul.f32 %v517, %v539
    %v542 = vmul.f32 %v518, %v540
    %v544 = vlaneseq
    %v545 = vshrl.u32 %v544, 7
    %v546 = vsub.s32 0, %v545
    %v547 = vrot.slane %v499, %v546
    %v548 = vlaneseq
    %v549 = vshrl.u32 %v548, 7
    %v550 = vsub.s32 1, %v549
    %v551 = vrot.slane %v499, %v550
    %v554 = vmul.f32 %v541, %v547
    %v555 = vmul.f32 %v542, %v551
    %v557 = vlaneseq
    %v558 = vshrl.u32 %v557, 7
    %v559 = vsub.s32 0, %v558
    %v560 = vrot.slane %v500, %v559
    %v561 = vlaneseq
    %v562 = vshrl.u32 %v561, 7
    %v563 = vsub.s32 1, %v562
    %v564 = vrot.slane %v500, %v563
    %v567 = vadd.f32 %v554, %v560
    %v568 = vadd.f32 %v555, %v564
    %vm569 = vcmp.ge.f32.partialorder %v567, 0.0
    %vm570 = vcmp.ge.f32.partialorder %v568, 0.0
    %v571 = vmul.f32 %v567, 0.01
    %v572 = vmul.f32 %v568, 0.01
    %v573 = vsel %vm569, %v567, %v571
    %v574 = vsel %vm570, %v568, %v572
    %v575 = vpack.c.bf16 %v573, %v573
    %v576 = vpack.c.bf16 %v574, %v574
    %s577 = scalar_lea.vmem [#allocation2], 256
    %v578 = vld [vmem:[%s577] sm:$0xff]
    %v579 = vld [vmem:[%s577 + $0x8] sm:$0xff]
    %v580 = vld [vmem:[%s577 + $0x10] sm:$0xff]
    %v581 = vld [vmem:[%s577 + $0x18] sm:$0xff]
    %v582 = vld [vmem:[%s577 + $0x20] sm:$0xff]
    %v583 = vld [vmem:[%s577 + $0x28] sm:$0xff]
    %v584 = vld [vmem:[%s577 + $0x30] sm:$0xff]
    %v585 = vld [vmem:[%s577 + $0x38] sm:$0xff]
    %v586 = vld [vmem:[%s577 + $0x40] sm:$0xff]
    %v587 = vld [vmem:[%s577 + $0x48] sm:$0xff]
    %v588 = vld [vmem:[%s577 + $0x50] sm:$0xff]
    %v589 = vld [vmem:[%s577 + $0x58] sm:$0xff]
    %v590 = vld [vmem:[%s577 + $0x60] sm:$0xff]
    %v591 = vld [vmem:[%s577 + $0x68] sm:$0xff]
    %v592 = vld [vmem:[%s577 + $0x70] sm:$0xff]
    %v593 = vld [vmem:[%s577 + $0x78] sm:$0xff]
    %v594 = vld [vmem:[%s577 + $0x80] sm:$0xff]
    %v595 = vld [vmem:[%s577 + $0x88] sm:$0xff]
    %v596 = vld [vmem:[%s577 + $0x90] sm:$0xff]
    %v597 = vld [vmem:[%s577 + $0x98] sm:$0xff]
    %v598 = vld [vmem:[%s577 + $0xa0] sm:$0xff]
    %v599 = vld [vmem:[%s577 + $0xa8] sm:$0xff]
    %v600 = vld [vmem:[%s577 + $0xb0] sm:$0xff]
    %v601 = vld [vmem:[%s577 + $0xb8] sm:$0xff]
    %v602 = vld [vmem:[%s577 + $0xc0] sm:$0xff]
    %v603 = vld [vmem:[%s577 + $0xc8] sm:$0xff]
    %v604 = vld [vmem:[%s577 + $0xd0] sm:$0xff]
    %v605 = vld [vmem:[%s577 + $0xd8] sm:$0xff]
    %v606 = vld [vmem:[%s577 + $0xe0] sm:$0xff]
    %v607 = vld [vmem:[%s577 + $0xe8] sm:$0xff]
    %v608 = vld [vmem:[%s577 + $0xf0] sm:$0xff]
    %v609 = vld [vmem:[%s577 + $0xf8] sm:$0xff]
    %v642 = vunpack.c.l.b16 %v578
    %v643 = vunpack.c.h.b16 %v578
    %v644 = vunpack.c.l.b16 %v579
    %v645 = vunpack.c.h.b16 %v579
    %v646 = vunpack.c.l.b16 %v580
    %v647 = vunpack.c.h.b16 %v580
    %v648 = vunpack.c.l.b16 %v581
    %v649 = vunpack.c.h.b16 %v581
    %v650 = vunpack.c.l.b16 %v582
    %v651 = vunpack.c.h.b16 %v582
    %v652 = vunpack.c.l.b16 %v583
    %v653 = vunpack.c.h.b16 %v583
    %v654 = vunpack.c.l.b16 %v584
    %v655 = vunpack.c.h.b16 %v584
    %v656 = vunpack.c.l.b16 %v585
    %v657 = vunpack.c.h.b16 %v585
    %v658 = vunpack.c.l.b16 %v586
    %v659 = vunpack.c.h.b16 %v586
    %v660 = vunpack.c.l.b16 %v587
    %v661 = vunpack.c.h.b16 %v587
    %v662 = vunpack.c.l.b16 %v588
    %v663 = vunpack.c.h.b16 %v588
    %v664 = vunpack.c.l.b16 %v589
    %v665 = vunpack.c.h.b16 %v589
    %v666 = vunpack.c.l.b16 %v590
    %v667 = vunpack.c.h.b16 %v590
    %v668 = vunpack.c.l.b16 %v591
    %v669 = vunpack.c.h.b16 %v591
    %v670 = vunpack.c.l.b16 %v592
    %v671 = vunpack.c.h.b16 %v592
    %v672 = vunpack.c.l.b16 %v593
    %v673 = vunpack.c.h.b16 %v593
    %v674 = vunpack.c.l.b16 %v594
    %v675 = vunpack.c.h.b16 %v594
    %v676 = vunpack.c.l.b16 %v595
    %v677 = vunpack.c.h.b16 %v595
    %v678 = vunpack.c.l.b16 %v596
    %v679 = vunpack.c.h.b16 %v596
    %v680 = vunpack.c.l.b16 %v597
    %v681 = vunpack.c.h.b16 %v597
    %v682 = vunpack.c.l.b16 %v598
    %v683 = vunpack.c.h.b16 %v598
    %v684 = vunpack.c.l.b16 %v599
    %v685 = vunpack.c.h.b16 %v599
    %v686 = vunpack.c.l.b16 %v600
    %v687 = vunpack.c.h.b16 %v600
    %v688 = vunpack.c.l.b16 %v601
    %v689 = vunpack.c.h.b16 %v601
    %v690 = vunpack.c.l.b16 %v602
    %v691 = vunpack.c.h.b16 %v602
    %v692 = vunpack.c.l.b16 %v603
    %v693 = vunpack.c.h.b16 %v603
    %v694 = vunpack.c.l.b16 %v604
    %v695 = vunpack.c.h.b16 %v604
    %v696 = vunpack.c.l.b16 %v605
    %v697 = vunpack.c.h.b16 %v605
    %v698 = vunpack.c.l.b16 %v606
    %v699 = vunpack.c.h.b16 %v606
    %v700 = vunpack.c.l.b16 %v607
    %v701 = vunpack.c.h.b16 %v607
    %v702 = vunpack.c.l.b16 %v608
    %v703 = vunpack.c.h.b16 %v608
    %v704 = vunpack.c.l.b16 %v609
    %v705 = vunpack.c.h.b16 %v609
    %v706 = vpack.c.b16 %v644, %v642
    %v707 = vpack.c.b16 %v645, %v643
    %v708 = vpack.c.b16 %v648, %v646
    %v709 = vpack.c.b16 %v649, %v647
    %v710 = vpack.c.b16 %v652, %v650
    %v711 = vpack.c.b16 %v653, %v651
    %v712 = vpack.c.b16 %v656, %v654
    %v713 = vpack.c.b16 %v657, %v655
    %v714 = vpack.c.b16 %v660, %v658
    %v715 = vpack.c.b16 %v661, %v659
    %v716 = vpack.c.b16 %v664, %v662
    %v717 = vpack.c.b16 %v665, %v663
    %v718 = vpack.c.b16 %v668, %v666
    %v719 = vpack.c.b16 %v669, %v667
    %v720 = vpack.c.b16 %v672, %v670
    %v721 = vpack.c.b16 %v673, %v671
    %v722 = vpack.c.b16 %v676, %v674
    %v723 = vpack.c.b16 %v677, %v675
    %v724 = vpack.c.b16 %v680, %v678
    %v725 = vpack.c.b16 %v681, %v679
    %v726 = vpack.c.b16 %v684, %v682
    %v727 = vpack.c.b16 %v685, %v683
    %v728 = vpack.c.b16 %v688, %v686
    %v729 = vpack.c.b16 %v689, %v687
    %v730 = vpack.c.b16 %v692, %v690
    %v731 = vpack.c.b16 %v693, %v691
    %v732 = vpack.c.b16 %v696, %v694
    %v733 = vpack.c.b16 %v697, %v695
    %v734 = vpack.c.b16 %v700, %v698
    %v735 = vpack.c.b16 %v701, %v699
    %v736 = vpack.c.b16 %v704, %v702
    %v737 = vpack.c.b16 %v705, %v703
    %770 = vmatprep.subr.bf16.mxu0 %v721
    %771 = vmatpush1.bf16.msra.mxu0 %v720
    %772 = vmatprep.subr.bf16.mxu0 %v719
    %773 = vmatpush1.bf16.msra.mxu0 %v718
    %774 = vmatprep.subr.bf16.mxu0 %v717
    %775 = vmatpush1.bf16.msra.mxu0 %v716
    %776 = vmatprep.subr.bf16.mxu0 %v715
    %777 = vmatpush1.bf16.msra.mxu0 %v714
    %778 = vmatprep.subr.bf16.mxu0 %v713
    %779 = vmatpush1.bf16.msra.mxu0 %v712
    %780 = vmatprep.subr.bf16.mxu0 %v711
    %781 = vmatpush1.bf16.msra.mxu0 %v710
    %782 = vmatprep.subr.bf16.mxu0 %v709
    %783 = vmatpush1.bf16.msra.mxu0 %v708
    %784 = vmatprep.subr.bf16.mxu0 %v707
    %785 = vmatpush1.bf16.msra.mxu0 %v706
    %786 = vmatprep.subr.bf16.mxu0 %v737
    %787 = vmatpush2.bf16.msra.mxu0 %v736
    %788 = vmatprep.subr.bf16.mxu0 %v735
    %789 = vmatpush2.bf16.msra.mxu0 %v734
    %790 = vmatprep.subr.bf16.mxu0 %v733
    %791 = vmatpush2.bf16.msra.mxu0 %v732
    %792 = vmatprep.subr.bf16.mxu0 %v731
    %793 = vmatpush2.bf16.msra.mxu0 %v730
    %794 = vmatprep.subr.bf16.mxu0 %v729
    %795 = vmatpush2.bf16.msra.mxu0 %v728
    %796 = vmatprep.subr.bf16.mxu0 %v727
    %797 = vmatpush2.bf16.msra.mxu0 %v726
    %798 = vmatprep.subr.bf16.mxu0 %v725
    %799 = vmatpush2.bf16.msra.mxu0 %v724
    %800 = vmatprep.subr.bf16.mxu0 %v723
    %801 = vmatpush2.bf16.msra.mxu0 %v722
    %802 = vmatprep.mubr.bf16.mxu0 %v576
    %803 = vmatmul.mubr.bf16.gmra.mxu0 %v575
    %v804 = vpop.f32.mrf.mxu0
    %v805 = vadd.f32 0.0, %v804
    %v806 = vpop.f32.mrf.mxu0
    %v807 = vadd.f32 0.0, %v806
    %v808 = vpop.f32.mrf.mxu0
    %v809 = vpop.f32.mrf.mxu0
    %810 = vdwg.mxu0
    %s811 = scalar_lea.vmem %s6, 2
    %v812 = vld [vmem:[%s811] sm:$0x3]
    %s813 = scalar_lea.vmem %s7, 2
    %v814 = vld [vmem:[%s813] sm:$0x3]
    %v815 = vsel %vm188, %v805, 0.0
    %v816 = vrot.slane %v815, 4
    %v817 = vadd.f32 %v815, %v816
    %v818 = vrot.slane %v817, 2
    %v819 = vadd.f32 %v817, %v818
    %v820 = vrot.slane %v819, 1
    %v821 = vadd.f32 %v819, %v820
    %v822 = vsel %vm188, %v807, 0.0
    %v823 = vrot.slane %v822, 4
    %v824 = vadd.f32 %v822, %v823
    %v825 = vrot.slane %v824, 2
    %v826 = vadd.f32 %v824, %v825
    %v827 = vrot.slane %v826, 1
    %v828 = vadd.f32 %v826, %v827
    %v829 = vmul.f32 %v821, %v203
    %v830 = vmul.f32 %v828, %v203
    %v831 = vsub.f32 %v805, %v829
    %v832 = vsub.f32 %v807, %v830
    %v833 = vmul.f32 %v831, %v831
    %v834 = vmul.f32 %v832, %v832
    %v835 = vsel %vm188, %v833, 0.0
    %v836 = vrot.slane %v835, 4
    %v837 = vadd.f32 %v835, %v836
    %v838 = vrot.slane %v837, 2
    %v839 = vadd.f32 %v837, %v838
    %v840 = vrot.slane %v839, 1
    %v841 = vadd.f32 %v839, %v840
    %v842 = vsel %vm188, %v834, 0.0
    %v843 = vrot.slane %v842, 4
    %v844 = vadd.f32 %v842, %v843
    %v845 = vrot.slane %v844, 2
    %v846 = vadd.f32 %v844, %v845
    %v847 = vrot.slane %v846, 1
    %v848 = vadd.f32 %v846, %v847
    %v849 = vmul.f32 %v841, %v203
    %v850 = vmul.f32 %v848, %v203
    %v851 = vadd.f32 %v849, 1e-05
    %v852 = vadd.f32 %v850, 1e-05
    %v853 = vrsqrt.pop %v851
    %v854 = vrsqrt.pop %v852
    %v855 = vmul.f32 %v831, %v853
    %v856 = vmul.f32 %v832, %v854
    %v858 = vlaneseq
    %v859 = vshrl.u32 %v858, 7
    %v860 = vsub.s32 0, %v859
    %v861 = vrot.slane %v812, %v860
    %v862 = vlaneseq
    %v863 = vshrl.u32 %v862, 7
    %v864 = vsub.s32 1, %v863
    %v865 = vrot.slane %v812, %v864
    %v868 = vmul.f32 %v855, %v861
    %v869 = vmul.f32 %v856, %v865
    %v871 = vlaneseq
    %v872 = vshrl.u32 %v871, 7
    %v873 = vsub.s32 0, %v872
    %v874 = vrot.slane %v814, %v873
    %v875 = vlaneseq
    %v876 = vshrl.u32 %v875, 7
    %v877 = vsub.s32 1, %v876
    %v878 = vrot.slane %v814, %v877
    %v881 = vadd.f32 %v868, %v874
    %v882 = vadd.f32 %v869, %v878
    %vm883 = vcmp.ge.f32.partialorder %v881, 0.0
    %vm884 = vcmp.ge.f32.partialorder %v882, 0.0
    %v885 = vmul.f32 %v881, 0.01
    %v886 = vmul.f32 %v882, 0.01
    %v887 = vsel %vm883, %v881, %v885
    %v888 = vsel %vm884, %v882, %v886
    %v889 = vpack.c.bf16 %v887, %v887
    %v890 = vpack.c.bf16 %v888, %v888
    %s891 = scalar_lea.vmem [#allocation2], 512
    %v892 = vld [vmem:[%s891] sm:$0xff]
    %v893 = vld [vmem:[%s891 + $0x8] sm:$0xff]
    %v894 = vld [vmem:[%s891 + $0x10] sm:$0xff]
    %v895 = vld [vmem:[%s891 + $0x18] sm:$0xff]
    %v896 = vld [vmem:[%s891 + $0x20] sm:$0xff]
    %v897 = vld [vmem:[%s891 + $0x28] sm:$0xff]
    %v898 = vld [vmem:[%s891 + $0x30] sm:$0xff]
    %v899 = vld [vmem:[%s891 + $0x38] sm:$0xff]
    %v900 = vld [vmem:[%s891 + $0x40] sm:$0xff]
    %v901 = vld [vmem:[%s891 + $0x48] sm:$0xff]
    %v902 = vld [vmem:[%s891 + $0x50] sm:$0xff]
    %v903 = vld [vmem:[%s891 + $0x58] sm:$0xff]
    %v904 = vld [vmem:[%s891 + $0x60] sm:$0xff]
    %v905 = vld [vmem:[%s891 + $0x68] sm:$0xff]
    %v906 = vld [vmem:[%s891 + $0x70] sm:$0xff]
    %v907 = vld [vmem:[%s891 + $0x78] sm:$0xff]
    %v908 = vld [vmem:[%s891 + $0x80] sm:$0xff]
    %v909 = vld [vmem:[%s891 + $0x88] sm:$0xff]
    %v910 = vld [vmem:[%s891 + $0x90] sm:$0xff]
    %v911 = vld [vmem:[%s891 + $0x98] sm:$0xff]
    %v912 = vld [vmem:[%s891 + $0xa0] sm:$0xff]
    %v913 = vld [vmem:[%s891 + $0xa8] sm:$0xff]
    %v914 = vld [vmem:[%s891 + $0xb0] sm:$0xff]
    %v915 = vld [vmem:[%s891 + $0xb8] sm:$0xff]
    %v916 = vld [vmem:[%s891 + $0xc0] sm:$0xff]
    %v917 = vld [vmem:[%s891 + $0xc8] sm:$0xff]
    %v918 = vld [vmem:[%s891 + $0xd0] sm:$0xff]
    %v919 = vld [vmem:[%s891 + $0xd8] sm:$0xff]
    %v920 = vld [vmem:[%s891 + $0xe0] sm:$0xff]
    %v921 = vld [vmem:[%s891 + $0xe8] sm:$0xff]
    %v922 = vld [vmem:[%s891 + $0xf0] sm:$0xff]
    %v923 = vld [vmem:[%s891 + $0xf8] sm:$0xff]
    %v956 = vunpack.c.l.b16 %v892
    %v957 = vunpack.c.h.b16 %v892
    %v958 = vunpack.c.l.b16 %v893
    %v959 = vunpack.c.h.b16 %v893
    %v960 = vunpack.c.l.b16 %v894
    %v961 = vunpack.c.h.b16 %v894
    %v962 = vunpack.c.l.b16 %v895
    %v963 = vunpack.c.h.b16 %v895
    %v964 = vunpack.c.l.b16 %v896
    %v965 = vunpack.c.h.b16 %v896
    %v966 = vunpack.c.l.b16 %v897
    %v967 = vunpack.c.h.b16 %v897
    %v968 = vunpack.c.l.b16 %v898
    %v969 = vunpack.c.h.b16 %v898
    %v970 = vunpack.c.l.b16 %v899
    %v971 = vunpack.c.h.b16 %v899
    %v972 = vunpack.c.l.b16 %v900
    %v973 = vunpack.c.h.b16 %v900
    %v974 = vunpack.c.l.b16 %v901
    %v975 = vunpack.c.h.b16 %v901
    %v976 = vunpack.c.l.b16 %v902
    %v977 = vunpack.c.h.b16 %v902
    %v978 = vunpack.c.l.b16 %v903
    %v979 = vunpack.c.h.b16 %v903
    %v980 = vunpack.c.l.b16 %v904
    %v981 = vunpack.c.h.b16 %v904
    %v982 = vunpack.c.l.b16 %v905
    %v983 = vunpack.c.h.b16 %v905
    %v984 = vunpack.c.l.b16 %v906
    %v985 = vunpack.c.h.b16 %v906
    %v986 = vunpack.c.l.b16 %v907
    %v987 = vunpack.c.h.b16 %v907
    %v988 = vunpack.c.l.b16 %v908
    %v989 = vunpack.c.h.b16 %v908
    %v990 = vunpack.c.l.b16 %v909
    %v991 = vunpack.c.h.b16 %v909
    %v992 = vunpack.c.l.b16 %v910
    %v993 = vunpack.c.h.b16 %v910
    %v994 = vunpack.c.l.b16 %v911
    %v995 = vunpack.c.h.b16 %v911
    %v996 = vunpack.c.l.b16 %v912
    %v997 = vunpack.c.h.b16 %v912
    %v998 = vunpack.c.l.b16 %v913
    %v999 = vunpack.c.h.b16 %v913
    %v1000 = vunpack.c.l.b16 %v914
    %v1001 = vunpack.c.h.b16 %v914
    %v1002 = vunpack.c.l.b16 %v915
    %v1003 = vunpack.c.h.b16 %v915
    %v1004 = vunpack.c.l.b16 %v916
    %v1005 = vunpack.c.h.b16 %v916
    %v1006 = vunpack.c.l.b16 %v917
    %v1007 = vunpack.c.h.b16 %v917
    %v1008 = vunpack.c.l.b16 %v918
    %v1009 = vunpack.c.h.b16 %v918
    %v1010 = vunpack.c.l.b16 %v919
    %v1011 = vunpack.c.h.b16 %v919
    %v1012 = vunpack.c.l.b16 %v920
    %v1013 = vunpack.c.h.b16 %v920
    %v1014 = vunpack.c.l.b16 %v921
    %v1015 = vunpack.c.h.b16 %v921
    %v1016 = vunpack.c.l.b16 %v922
    %v1017 = vunpack.c.h.b16 %v922
    %v1018 = vunpack.c.l.b16 %v923
    %v1019 = vunpack.c.h.b16 %v923
    %v1020 = vpack.c.b16 %v958, %v956
    %v1021 = vpack.c.b16 %v959, %v957
    %v1022 = vpack.c.b16 %v962, %v960
    %v1023 = vpack.c.b16 %v963, %v961
    %v1024 = vpack.c.b16 %v966, %v964
    %v1025 = vpack.c.b16 %v967, %v965
    %v1026 = vpack.c.b16 %v970, %v968
    %v1027 = vpack.c.b16 %v971, %v969
    %v1028 = vpack.c.b16 %v974, %v972
    %v1029 = vpack.c.b16 %v975, %v973
    %v1030 = vpack.c.b16 %v978, %v976
    %v1031 = vpack.c.b16 %v979, %v977
    %v1032 = vpack.c.b16 %v982, %v980
    %v1033 = vpack.c.b16 %v983, %v981
    %v1034 = vpack.c.b16 %v986, %v984
    %v1035 = vpack.c.b16 %v987, %v985
    %v1036 = vpack.c.b16 %v990, %v988
    %v1037 = vpack.c.b16 %v991, %v989
    %v1038 = vpack.c.b16 %v994, %v992
    %v1039 = vpack.c.b16 %v995, %v993
    %v1040 = vpack.c.b16 %v998, %v996
    %v1041 = vpack.c.b16 %v999, %v997
    %v1042 = vpack.c.b16 %v1002, %v1000
    %v1043 = vpack.c.b16 %v1003, %v1001
    %v1044 = vpack.c.b16 %v1006, %v1004
    %v1045 = vpack.c.b16 %v1007, %v1005
    %v1046 = vpack.c.b16 %v1010, %v1008
    %v1047 = vpack.c.b16 %v1011, %v1009
    %v1048 = vpack.c.b16 %v1014, %v1012
    %v1049 = vpack.c.b16 %v1015, %v1013
    %v1050 = vpack.c.b16 %v1018, %v1016
    %v1051 = vpack.c.b16 %v1019, %v1017
    %1084 = vmatprep.subr.bf16.mxu0 %v1035
    %1085 = vmatpush1.bf16.msra.mxu0 %v1034
    %1086 = vmatprep.subr.bf16.mxu0 %v1033
    %1087 = vmatpush1.bf16.msra.mxu0 %v1032
    %1088 = vmatprep.subr.bf16.mxu0 %v1031
    %1089 = vmatpush1.bf16.msra.mxu0 %v1030
    %1090 = vmatprep.subr.bf16.mxu0 %v1029
    %1091 = vmatpush1.bf16.msra.mxu0 %v1028
    %1092 = vmatprep.subr.bf16.mxu0 %v1027
    %1093 = vmatpush1.bf16.msra.mxu0 %v1026
    %1094 = vmatprep.subr.bf16.mxu0 %v1025
    %1095 = vmatpush1.bf16.msra.mxu0 %v1024
    %1096 = vmatprep.subr.bf16.mxu0 %v1023
    %1097 = vmatpush1.bf16.msra.mxu0 %v1022
    %1098 = vmatprep.subr.bf16.mxu0 %v1021
    %1099 = vmatpush1.bf16.msra.mxu0 %v1020
    %1100 = vmatprep.subr.bf16.mxu0 %v1051
    %1101 = vmatpush2.bf16.msra.mxu0 %v1050
    %1102 = vmatprep.subr.bf16.mxu0 %v1049
    %1103 = vmatpush2.bf16.msra.mxu0 %v1048
    %1104 = vmatprep.subr.bf16.mxu0 %v1047
    %1105 = vmatpush2.bf16.msra.mxu0 %v1046
    %1106 = vmatprep.subr.bf16.mxu0 %v1045
    %1107 = vmatpush2.bf16.msra.mxu0 %v1044
    %1108 = vmatprep.subr.bf16.mxu0 %v1043
    %1109 = vmatpush2.bf16.msra.mxu0 %v1042
    %1110 = vmatprep.subr.bf16.mxu0 %v1041
    %1111 = vmatpush2.bf16.msra.mxu0 %v1040
    %1112 = vmatprep.subr.bf16.mxu0 %v1039
    %1113 = vmatpush2.bf16.msra.mxu0 %v1038
    %1114 = vmatprep.subr.bf16.mxu0 %v1037
    %1115 = vmatpush2.bf16.msra.mxu0 %v1036
    %1116 = vmatprep.mubr.bf16.mxu0 %v890
    %1117 = vmatmul.mubr.bf16.gmra.mxu0 %v889
    %v1118 = vpop.f32.mrf.mxu0
    %v1119 = vadd.f32 0.0, %v1118
    %v1120 = vpop.f32.mrf.mxu0
    %v1121 = vadd.f32 0.0, %v1120
    %v1122 = vpop.f32.mrf.mxu0
    %v1123 = vpop.f32.mrf.mxu0
    %1124 = vdwg.mxu0
    %s1125 = scalar_lea.vmem %s6, 4
    %v1126 = vld [vmem:[%s1125] sm:$0x3]
    %s1127 = scalar_lea.vmem %s7, 4
    %v1128 = vld [vmem:[%s1127] sm:$0x3]
    %v1129 = vsel %vm188, %v1119, 0.0
    %v1130 = vrot.slane %v1129, 4
    %v1131 = vadd.f32 %v1129, %v1130
    %v1132 = vrot.slane %v1131, 2
    %v1133 = vadd.f32 %v1131, %v1132
    %v1134 = vrot.slane %v1133, 1
    %v1135 = vadd.f32 %v1133, %v1134
    %v1136 = vsel %vm188, %v1121, 0.0
    %v1137 = vrot.slane %v1136, 4
    %v1138 = vadd.f32 %v1136, %v1137
    %v1139 = vrot.slane %v1138, 2
    %v1140 = vadd.f32 %v1138, %v1139
    %v1141 = vrot.slane %v1140, 1
    %v1142 = vadd.f32 %v1140, %v1141
    %v1143 = vmul.f32 %v1135, %v203
    %v1144 = vmul.f32 %v1142, %v203
    %v1145 = vsub.f32 %v1119, %v1143
    %v1146 = vsub.f32 %v1121, %v1144
    %v1147 = vmul.f32 %v1145, %v1145
    %v1148 = vmul.f32 %v1146, %v1146
    %v1149 = vsel %vm188, %v1147, 0.0
    %v1150 = vrot.slane %v1149, 4
    %v1151 = vadd.f32 %v1149, %v1150
    %v1152 = vrot.slane %v1151, 2
    %v1153 = vadd.f32 %v1151, %v1152
    %v1154 = vrot.slane %v1153, 1
    %v1155 = vadd.f32 %v1153, %v1154
    %v1156 = vsel %vm188, %v1148, 0.0
    %v1157 = vrot.slane %v1156, 4
    %v1158 = vadd.f32 %v1156, %v1157
    %v1159 = vrot.slane %v1158, 2
    %v1160 = vadd.f32 %v1158, %v1159
    %v1161 = vrot.slane %v1160, 1
    %v1162 = vadd.f32 %v1160, %v1161
    %v1163 = vmul.f32 %v1155, %v203
    %v1164 = vmul.f32 %v1162, %v203
    %v1165 = vadd.f32 %v1163, 1e-05
    %v1166 = vadd.f32 %v1164, 1e-05
    %v1167 = vrsqrt.pop %v1165
    %v1168 = vrsqrt.pop %v1166
    %v1169 = vmul.f32 %v1145, %v1167
    %v1170 = vmul.f32 %v1146, %v1168
    %v1172 = vlaneseq
    %v1173 = vshrl.u32 %v1172, 7
    %v1174 = vsub.s32 0, %v1173
    %v1175 = vrot.slane %v1126, %v1174
    %v1176 = vlaneseq
    %v1177 = vshrl.u32 %v1176, 7
    %v1178 = vsub.s32 1, %v1177
    %v1179 = vrot.slane %v1126, %v1178
    %v1182 = vmul.f32 %v1169, %v1175
    %v1183 = vmul.f32 %v1170, %v1179
    %v1185 = vlaneseq
    %v1186 = vshrl.u32 %v1185, 7
    %v1187 = vsub.s32 0, %v1186
    %v1188 = vrot.slane %v1128, %v1187
    %v1189 = vlaneseq
    %v1190 = vshrl.u32 %v1189, 7
    %v1191 = vsub.s32 1, %v1190
    %v1192 = vrot.slane %v1128, %v1191
    %v1195 = vadd.f32 %v1182, %v1188
    %v1196 = vadd.f32 %v1183, %v1192
    %vm1197 = vcmp.ge.f32.partialorder %v1195, 0.0
    %vm1198 = vcmp.ge.f32.partialorder %v1196, 0.0
    %v1199 = vmul.f32 %v1195, 0.01
    %v1200 = vmul.f32 %v1196, 0.01
    %v1201 = vsel %vm1197, %v1195, %v1199
    %v1202 = vsel %vm1198, %v1196, %v1200
    %v1203 = vpack.c.bf16 %v1201, %v1201
    %v1204 = vpack.c.bf16 %v1202, %v1202
    %s1205 = scalar_lea.vmem [#allocation2], 768
    %v1206 = vld [vmem:[%s1205] sm:$0xff]
    %v1207 = vld [vmem:[%s1205 + $0x8] sm:$0xff]
    %v1208 = vld [vmem:[%s1205 + $0x10] sm:$0xff]
    %v1209 = vld [vmem:[%s1205 + $0x18] sm:$0xff]
    %v1210 = vld [vmem:[%s1205 + $0x20] sm:$0xff]
    %v1211 = vld [vmem:[%s1205 + $0x28] sm:$0xff]
    %v1212 = vld [vmem:[%s1205 + $0x30] sm:$0xff]
    %v1213 = vld [vmem:[%s1205 + $0x38] sm:$0xff]
    %v1214 = vld [vmem:[%s1205 + $0x40] sm:$0xff]
    %v1215 = vld [vmem:[%s1205 + $0x48] sm:$0xff]
    %v1216 = vld [vmem:[%s1205 + $0x50] sm:$0xff]
    %v1217 = vld [vmem:[%s1205 + $0x58] sm:$0xff]
    %v1218 = vld [vmem:[%s1205 + $0x60] sm:$0xff]
    %v1219 = vld [vmem:[%s1205 + $0x68] sm:$0xff]
    %v1220 = vld [vmem:[%s1205 + $0x70] sm:$0xff]
    %v1221 = vld [vmem:[%s1205 + $0x78] sm:$0xff]
    %v1222 = vld [vmem:[%s1205 + $0x80] sm:$0xff]
    %v1223 = vld [vmem:[%s1205 + $0x88] sm:$0xff]
    %v1224 = vld [vmem:[%s1205 + $0x90] sm:$0xff]
    %v1225 = vld [vmem:[%s1205 + $0x98] sm:$0xff]
    %v1226 = vld [vmem:[%s1205 + $0xa0] sm:$0xff]
    %v1227 = vld [vmem:[%s1205 + $0xa8] sm:$0xff]
    %v1228 = vld [vmem:[%s1205 + $0xb0] sm:$0xff]
    %v1229 = vld [vmem:[%s1205 + $0xb8] sm:$0xff]
    %v1230 = vld [vmem:[%s1205 + $0xc0] sm:$0xff]
    %v1231 = vld [vmem:[%s1205 + $0xc8] sm:$0xff]
    %v1232 = vld [vmem:[%s1205 + $0xd0] sm:$0xff]
    %v1233 = vld [vmem:[%s1205 + $0xd8] sm:$0xff]
    %v1234 = vld [vmem:[%s1205 + $0xe0] sm:$0xff]
    %v1235 = vld [vmem:[%s1205 + $0xe8] sm:$0xff]
    %v1236 = vld [vmem:[%s1205 + $0xf0] sm:$0xff]
    %v1237 = vld [vmem:[%s1205 + $0xf8] sm:$0xff]
    %v1270 = vunpack.c.l.b16 %v1206
    %v1271 = vunpack.c.h.b16 %v1206
    %v1272 = vunpack.c.l.b16 %v1207
    %v1273 = vunpack.c.h.b16 %v1207
    %v1274 = vunpack.c.l.b16 %v1208
    %v1275 = vunpack.c.h.b16 %v1208
    %v1276 = vunpack.c.l.b16 %v1209
    %v1277 = vunpack.c.h.b16 %v1209
    %v1278 = vunpack.c.l.b16 %v1210
    %v1279 = vunpack.c.h.b16 %v1210
    %v1280 = vunpack.c.l.b16 %v1211
    %v1281 = vunpack.c.h.b16 %v1211
    %v1282 = vunpack.c.l.b16 %v1212
    %v1283 = vunpack.c.h.b16 %v1212
    %v1284 = vunpack.c.l.b16 %v1213
    %v1285 = vunpack.c.h.b16 %v1213
    %v1286 = vunpack.c.l.b16 %v1214
    %v1287 = vunpack.c.h.b16 %v1214
    %v1288 = vunpack.c.l.b16 %v1215
    %v1289 = vunpack.c.h.b16 %v1215
    %v1290 = vunpack.c.l.b16 %v1216
    %v1291 = vunpack.c.h.b16 %v1216
    %v1292 = vunpack.c.l.b16 %v1217
    %v1293 = vunpack.c.h.b16 %v1217
    %v1294 = vunpack.c.l.b16 %v1218
    %v1295 = vunpack.c.h.b16 %v1218
    %v1296 = vunpack.c.l.b16 %v1219
    %v1297 = vunpack.c.h.b16 %v1219
    %v1298 = vunpack.c.l.b16 %v1220
    %v1299 = vunpack.c.h.b16 %v1220
    %v1300 = vunpack.c.l.b16 %v1221
    %v1301 = vunpack.c.h.b16 %v1221
    %v1302 = vunpack.c.l.b16 %v1222
    %v1303 = vunpack.c.h.b16 %v1222
    %v1304 = vunpack.c.l.b16 %v1223
    %v1305 = vunpack.c.h.b16 %v1223
    %v1306 = vunpack.c.l.b16 %v1224
    %v1307 = vunpack.c.h.b16 %v1224
    %v1308 = vunpack.c.l.b16 %v1225
    %v1309 = vunpack.c.h.b16 %v1225
    %v1310 = vunpack.c.l.b16 %v1226
    %v1311 = vunpack.c.h.b16 %v1226
    %v1312 = vunpack.c.l.b16 %v1227
    %v1313 = vunpack.c.h.b16 %v1227
    %v1314 = vunpack.c.l.b16 %v1228
    %v1315 = vunpack.c.h.b16 %v1228
    %v1316 = vunpack.c.l.b16 %v1229
    %v1317 = vunpack.c.h.b16 %v1229
    %v1318 = vunpack.c.l.b16 %v1230
    %v1319 = vunpack.c.h.b16 %v1230
    %v1320 = vunpack.c.l.b16 %v1231
    %v1321 = vunpack.c.h.b16 %v1231
    %v1322 = vunpack.c.l.b16 %v1232
    %v1323 = vunpack.c.h.b16 %v1232
    %v1324 = vunpack.c.l.b16 %v1233
    %v1325 = vunpack.c.h.b16 %v1233
    %v1326 = vunpack.c.l.b16 %v1234
    %v1327 = vunpack.c.h.b16 %v1234
    %v1328 = vunpack.c.l.b16 %v1235
    %v1329 = vunpack.c.h.b16 %v1235
    %v1330 = vunpack.c.l.b16 %v1236
    %v1331 = vunpack.c.h.b16 %v1236
    %v1332 = vunpack.c.l.b16 %v1237
    %v1333 = vunpack.c.h.b16 %v1237
    %v1334 = vpack.c.b16 %v1272, %v1270
    %v1335 = vpack.c.b16 %v1273, %v1271
    %v1336 = vpack.c.b16 %v1276, %v1274
    %v1337 = vpack.c.b16 %v1277, %v1275
    %v1338 = vpack.c.b16 %v1280, %v1278
    %v1339 = vpack.c.b16 %v1281, %v1279
    %v1340 = vpack.c.b16 %v1284, %v1282
    %v1341 = vpack.c.b16 %v1285, %v1283
    %v1342 = vpack.c.b16 %v1288, %v1286
    %v1343 = vpack.c.b16 %v1289, %v1287
    %v1344 = vpack.c.b16 %v1292, %v1290
    %v1345 = vpack.c.b16 %v1293, %v1291
    %v1346 = vpack.c.b16 %v1296, %v1294
    %v1347 = vpack.c.b16 %v1297, %v1295
    %v1348 = vpack.c.b16 %v1300, %v1298
    %v1349 = vpack.c.b16 %v1301, %v1299
    %v1350 = vpack.c.b16 %v1304, %v1302
    %v1351 = vpack.c.b16 %v1305, %v1303
    %v1352 = vpack.c.b16 %v1308, %v1306
    %v1353 = vpack.c.b16 %v1309, %v1307
    %v1354 = vpack.c.b16 %v1312, %v1310
    %v1355 = vpack.c.b16 %v1313, %v1311
    %v1356 = vpack.c.b16 %v1316, %v1314
    %v1357 = vpack.c.b16 %v1317, %v1315
    %v1358 = vpack.c.b16 %v1320, %v1318
    %v1359 = vpack.c.b16 %v1321, %v1319
    %v1360 = vpack.c.b16 %v1324, %v1322
    %v1361 = vpack.c.b16 %v1325, %v1323
    %v1362 = vpack.c.b16 %v1328, %v1326
    %v1363 = vpack.c.b16 %v1329, %v1327
    %v1364 = vpack.c.b16 %v1332, %v1330
    %v1365 = vpack.c.b16 %v1333, %v1331
    %1398 = vmatprep.subr.bf16.mxu0 %v1349
    %1399 = vmatpush1.bf16.msra.mxu0 %v1348
    %1400 = vmatprep.subr.bf16.mxu0 %v1347
    %1401 = vmatpush1.bf16.msra.mxu0 %v1346
    %1402 = vmatprep.subr.bf16.mxu0 %v1345
    %1403 = vmatpush1.bf16.msra.mxu0 %v1344
    %1404 = vmatprep.subr.bf16.mxu0 %v1343
    %1405 = vmatpush1.bf16.msra.mxu0 %v1342
    %1406 = vmatprep.subr.bf16.mxu0 %v1341
    %1407 = vmatpush1.bf16.msra.mxu0 %v1340
    %1408 = vmatprep.subr.bf16.mxu0 %v1339
    %1409 = vmatpush1.bf16.msra.mxu0 %v1338
    %1410 = vmatprep.subr.bf16.mxu0 %v1337
    %1411 = vmatpush1.bf16.msra.mxu0 %v1336
    %1412 = vmatprep.subr.bf16.mxu0 %v1335
    %1413 = vmatpush1.bf16.msra.mxu0 %v1334
    %1414 = vmatprep.subr.bf16.mxu0 %v1365
    %1415 = vmatpush2.bf16.msra.mxu0 %v1364
    %1416 = vmatprep.subr.bf16.mxu0 %v1363
    %1417 = vmatpush2.bf16.msra.mxu0 %v1362
    %1418 = vmatprep.subr.bf16.mxu0 %v1361
    %1419 = vmatpush2.bf16.msra.mxu0 %v1360
    %1420 = vmatprep.subr.bf16.mxu0 %v1359
    %1421 = vmatpush2.bf16.msra.mxu0 %v1358
    %1422 = vmatprep.subr.bf16.mxu0 %v1357
    %1423 = vmatpush2.bf16.msra.mxu0 %v1356
    %1424 = vmatprep.subr.bf16.mxu0 %v1355
    %1425 = vmatpush2.bf16.msra.mxu0 %v1354
    %1426 = vmatprep.subr.bf16.mxu0 %v1353
    %1427 = vmatpush2.bf16.msra.mxu0 %v1352
    %1428 = vmatprep.subr.bf16.mxu0 %v1351
    %1429 = vmatpush2.bf16.msra.mxu0 %v1350
    %1430 = vmatprep.mubr.bf16.mxu0 %v1204
    %1431 = vmatmul.mubr.bf16.gmra.mxu0 %v1203
    %v1432 = vpop.f32.mrf.mxu0
    %v1433 = vadd.f32 0.0, %v1432
    %v1434 = vpop.f32.mrf.mxu0
    %v1435 = vadd.f32 0.0, %v1434
    %v1436 = vpop.f32.mrf.mxu0
    %v1437 = vpop.f32.mrf.mxu0
    %1438 = vdwg.mxu0
    %s1439 = scalar_lea.vmem %s6, 6
    %v1440 = vld [vmem:[%s1439] sm:$0x3]
    %s1441 = scalar_lea.vmem %s7, 6
    %v1442 = vld [vmem:[%s1441] sm:$0x3]
    %v1443 = vsel %vm188, %v1433, 0.0
    %v1444 = vrot.slane %v1443, 4
    %v1445 = vadd.f32 %v1443, %v1444
    %v1446 = vrot.slane %v1445, 2
    %v1447 = vadd.f32 %v1445, %v1446
    %v1448 = vrot.slane %v1447, 1
    %v1449 = vadd.f32 %v1447, %v1448
    %v1450 = vsel %vm188, %v1435, 0.0
    %v1451 = vrot.slane %v1450, 4
    %v1452 = vadd.f32 %v1450, %v1451
    %v1453 = vrot.slane %v1452, 2
    %v1454 = vadd.f32 %v1452, %v1453
    %v1455 = vrot.slane %v1454, 1
    %v1456 = vadd.f32 %v1454, %v1455
    %v1457 = vmul.f32 %v1449, %v203
    %v1458 = vmul.f32 %v1456, %v203
    %v1459 = vsub.f32 %v1433, %v1457
    %v1460 = vsub.f32 %v1435, %v1458
    %v1461 = vmul.f32 %v1459, %v1459
    %v1462 = vmul.f32 %v1460, %v1460
    %v1463 = vsel %vm188, %v1461, 0.0
    %v1464 = vrot.slane %v1463, 4
    %v1465 = vadd.f32 %v1463, %v1464
    %v1466 = vrot.slane %v1465, 2
    %v1467 = vadd.f32 %v1465, %v1466
    %v1468 = vrot.slane %v1467, 1
    %v1469 = vadd.f32 %v1467, %v1468
    %v1470 = vsel %vm188, %v1462, 0.0
    %v1471 = vrot.slane %v1470, 4
    %v1472 = vadd.f32 %v1470, %v1471
    %v1473 = vrot.slane %v1472, 2
    %v1474 = vadd.f32 %v1472, %v1473
    %v1475 = vrot.slane %v1474, 1
    %v1476 = vadd.f32 %v1474, %v1475
    %v1477 = vmul.f32 %v1469, %v203
    %v1478 = vmul.f32 %v1476, %v203
    %v1479 = vadd.f32 %v1477, 1e-05
    %v1480 = vadd.f32 %v1478, 1e-05
    %v1481 = vrsqrt.pop %v1479
    %v1482 = vrsqrt.pop %v1480
    %v1483 = vmul.f32 %v1459, %v1481
    %v1484 = vmul.f32 %v1460, %v1482
    %v1486 = vlaneseq
    %v1487 = vshrl.u32 %v1486, 7
    %v1488 = vsub.s32 0, %v1487
    %v1489 = vrot.slane %v1440, %v1488
    %v1490 = vlaneseq
    %v1491 = vshrl.u32 %v1490, 7
    %v1492 = vsub.s32 1, %v1491
    %v1493 = vrot.slane %v1440, %v1492
    %v1496 = vmul.f32 %v1483, %v1489
    %v1497 = vmul.f32 %v1484, %v1493
    %v1499 = vlaneseq
    %v1500 = vshrl.u32 %v1499, 7
    %v1501 = vsub.s32 0, %v1500
    %v1502 = vrot.slane %v1442, %v1501
    %v1503 = vlaneseq
    %v1504 = vshrl.u32 %v1503, 7
    %v1505 = vsub.s32 1, %v1504
    %v1506 = vrot.slane %v1442, %v1505
    %v1509 = vadd.f32 %v1496, %v1502
    %v1510 = vadd.f32 %v1497, %v1506
    %vm1511 = vcmp.ge.f32.partialorder %v1509, 0.0
    %vm1512 = vcmp.ge.f32.partialorder %v1510, 0.0
    %v1513 = vmul.f32 %v1509, 0.01
    %v1514 = vmul.f32 %v1510, 0.01
    %v1515 = vsel %vm1511, %v1509, %v1513
    %v1516 = vsel %vm1512, %v1510, %v1514
    %v1519 = vcombine.low %v1515, %v1516
    %v1521 = vunpack.c.l.s4 1983009808
    %v1522 = vunpack.c.0.s8 %v1521
    %v1523 = vlaneseq
    %v1524 = vshrl.u32 %v1523, 7
    %v1525 = vsub.s32 %v1522, %v1524
    %v1526 = vrot.slane %v1519, %v1525
    %1528 = vst [vmem:[#allocation5] sm:$0xf] %v1526
    %v1529 = vmul.f32 %v1515, %v1515
    %v1530 = vld [vmem:[%s1] sm:$0x3]
    %1532 = vrot.lane.b32.xlu0 %v1530, 3
    %v1533 = vpop.permute.xlu0 %1532
    %v1535 = vmul.f32 %v1529, %v1533
    %1537 = vrot.lane.b32.xlu0 %v1535, 125
    %v1538 = vpop.permute.xlu0 %1537
    %v1540 = vadd.f32 %v1515, %v1538
    %v1541 = vmul.f32 %v1540, %v1540
    %vm1542 = vcmask 17408
    %v1543 = vsel %vm1542, %v1541, 0.0
    %1544 = vadd.xlane.f32.xlu0 %v1543
    %v1545 = vpop.xlane.xlu0 %1544
    %v1546 = vmax.f32 %v1545, 1e-24
    %v1547 = vrsqrt.pop %v1546
    %v1548 = vmul.f32 %v1540, %v1547
    %1549 = vst.msk [vmem:[%s9] sm:$0x3] %vm1542, %v1548
    %1550 = vrot.lane.b32.xlu0 %v1515, 125
    %v1551 = vpop.permute.xlu0 %1550
    %vm1553 = vcmask 25624
    %1554 = vst.msk [vmem:[%s9] sm:$0x3] %vm1553, %v1551
    // Predicated region
    $region38: #{rt_generator_forward.2} parent=1 // pred_check
      _
    $region39: #{rt_generator_forward.2} parent=1 // pred_check_branch
      %1556 = sbr.rel (0) target = $region41
    $region40: #{rt_generator_forward.2} parent=1 // pred_region
      %s1558 = ssub.s32 64, 64
      %1559 = vsyncadd [#allocation4], %s1558
      %s1561 = sshll.u32 [#allocation5], 4
      %s1562 = int_to_ptr.vmem [resolvable:$true] %s1561
      %1564 = dma.vmem_to_hbm [thread:$0]  %s1562, 64, %s8, [#allocation4]
    $region41: #{rt_generator_forward.2} parent=1 // pred_fallthru
      _
    // Predicated region
    $region42: #{rt_generator_forward.2} parent=1 // pred_check
      _
    $region43: #{rt_generator_forward.2} parent=1 // pred_check_branch
      %1566 = sbr.rel (0) target = $region45
    $region44: #{rt_generator_forward.2} parent=1 // pred_region
      _
    $region45: #{rt_generator_forward.2} parent=1 // pred_fallthru
      _
    // Predicated region
    $region46: #{rt_generator_forward.2} parent=1 // pred_check
      _
    $region47: #{rt_generator_forward.2} parent=1 // pred_check_branch
      %1568 = sbr.rel (0) target = $region49
    $region48: #{rt_generator_forward.2} parent=1 // pred_region
      %1569 = dma.done [#allocation4], 64
    $region49: #{rt_generator_forward.2} parent=1 // pred_fallthru
      _
    // Predicated region
    $region50: #{rt_generator_forward.2} parent=1 // pred_check
      _
    $region51: #{rt_generator_forward.2} parent=1 // pred_check_branch
      %1571 = sbr.rel (0) target = $region53
    $region52: #{rt_generator_forward.2} parent=1 // pred_region
      _
    $region53: #{rt_generator_forward.2} parent=1 // pred_fallthru
      _
    %1572 = vsyncpa [#allocation3], 1
    %1573 = vsyncpa [#allocation4], 1

</llo_original>
